<compile_context>
chip_gen: v7x
topology: tpu7x:2x2x1
jax: 0.10.0
libtpu: 0.0.40
codegen_flags: <defaults>
</compile_context>

<pallas_src>
import functools

import jax
import jax.numpy as jnp
from jax.experimental import pallas as pl
from jax.experimental.pallas import tpu as pltpu

ARGS = {"act_func": "relu", "seq_model": "gru"}  # synthetic config for the module
LANE = 128                                        # TPU vreg lane width
W_SLAB = 3 * LANE                                 # slab width (covers fused GRU gates)

_VMEM = pl.BlockSpec(memory_space=pltpu.MemorySpace.VMEM)

# Rows of the packed bias table (first block of the slab).
(B_MLP1A, B_MLP1B, B_GRU_I, B_GRU_H, B_MLP1,
 B_EDGE1, B_EDGE2, B_NODE1, B_NODE2, B_RO1, B_RO2) = range(11)
N_BIAS_ROWS = 11


def _act(x, kind):
    if kind == "relu":
        return jnp.maximum(x, 0.0)
    # PyTorch LeakyReLU default negative_slope = 0.01
    return jnp.where(x >= 0.0, x, 0.01 * x)


# --------------------------------------------------------------------------- #
# Single fused kernel: full OppoModelNet.forward
# --------------------------------------------------------------------------- #
def _fused_forward_kernel(obs_ref, h0_ref, idx_rc_ref, idx_cc_ref, slab_ref,
                          o_ref, hout_ref, *, dims, offs, act_kind, use_bf16):
    f32 = jnp.float32
    H = dims["dim_lstm_out"]
    obs_dim = dims["dim_in_node"] + dims["dim_in_u"]
    hid, mid = dims["hidden_dim"], dims["dim_mid"]
    dout, dlast = dims["dim_out"], dims["dim_last"]
    rfm, lhid = dims["rfm_hidden_dim"], dims["last_hidden"]
    E = idx_cc_ref.shape[0]
    N_pad = h0_ref.shape[0]

    def dot(a, b):
        if use_bf16:  # v6e/v7x option: bf16 operands, f32 accumulation
            a = a.astype(jnp.bfloat16)
            b = b.astype(jnp.bfloat16)
        return jnp.dot(a, b, preferred_element_type=f32)

    act = lambda v: _act(v, act_kind)
    # Static slices into the single packed weight/bias slab.
    W = lambda name, din, dcols: slab_ref[offs[name]:offs[name] + din, :dcols]
    bias = lambda row, width: slab_ref[offs["biases"] + row:offs["biases"] + row + 1, :width]

    # ---- encoder MLP: mlp1b(act(mlp1a(obs))) --------------------------------
    x = act(dot(obs_ref[...], W("w1a", obs_dim, hid)) + bias(B_MLP1A, hid))
    x = dot(x, W("w1b", hid, mid)) + bias(B_MLP1B, mid)

    # ---- GRU step (seq_len == 1), gates fused into 2 matmuls ---------------
    # Gate g occupies lanes [g*LANE, g*LANE + H); gate math is done at full
    # 128-lane width so padded lanes stay exactly 0 and the h store is a
    # full-width (lane-dense) vst.
    h0 = h0_ref[...]                                             # [N_pad, LANE]
    gi = dot(x, W("wi", mid, W_SLAB)) + bias(B_GRU_I, W_SLAB)    # [N_pad, 3*LANE]
    gh = dot(h0[:, :H], W("wh", H, W_SLAB)) + bias(B_GRU_H, W_SLAB)
    r = jax.nn.sigmoid(gi[:, 0:LANE] + gh[:, 0:LANE])
    z = jax.nn.sigmoid(gi[:, LANE:2 * LANE] + gh[:, LANE:2 * LANE])
    n = jnp.tanh(gi[:, 2 * LANE:3 * LANE] + r * gh[:, 2 * LANE:3 * LANE])
    h_new = (1.0 - z) * n + z * h0                               # padded lanes == 0
    hout_ref[...] = h_new

    # ---- mlp1 ---------------------------------------------------------------
    node_feat = dot(act(h_new[:, :H]), W("wm1", H, dout)) + bias(B_MLP1, dout)

    # ---- RFM edge update ----------------------------------------------------
    # edge input is concat(src node_feat, dst node_feat) (edge_feat / g_repr
    # are zero-width).  One lane-blocked dot gives both per-node projections;
    # the gather to E rows is done with in-kernel iota one-hot matmuls.
    proj = dot(node_feat, W("we", dout, 2 * LANE))               # [N_pad, 2*LANE]
    iota_en = jax.lax.broadcasted_iota(jnp.int32, (E, N_pad), 1)
    src_oh = (iota_en == idx_cc_ref[:, 0:1]).astype(f32)         # [E, N_pad]
    dst_oh = (iota_en == idx_cc_ref[:, 1:2]).astype(f32)         # [E, N_pad]
    e_pre = (dot(src_oh, proj[:, :rfm]) + dot(dst_oh, proj[:, LANE:LANE + rfm])
             + bias(B_EDGE1, rfm))                               # [E, rfm]
    e_feat = dot(act(e_pre), W("we2", rfm, dlast)) + bias(B_EDGE2, dlast)

    # ---- RFM node update ----------------------------------------------------
    # message-passing sum (fn.sum over in-edges) as a dst-one-hot matmul
    # (built directly in [N_pad, E] layout so the dot stays standard), then
    # fc_node -> relu -> fc_node2 (PyTorch hard-codes F.relu on this path).
    iota_ne = jax.lax.broadcasted_iota(jnp.int32, (N_pad, E), 0)
    dst_ohT = (iota_ne == idx_rc_ref[1:2, :]).astype(f32)        # [N_pad, E]
    h_msg = dot(dst_ohT, e_feat)                                 # [N_pad, dlast]
    n_pre = (dot(node_feat, W("wn_nf", dout, rfm)) + dot(h_msg, W("wn_h", dlast, rfm))
             + bias(B_NODE1, rfm))
    n_out = dot(jnp.maximum(n_pre, 0.0), W("wn2", rfm, dlast)) + bias(B_NODE2, dlast)

    # ---- readout (lane-dense 128-wide store; act_dims sliced in the wrapper) -
    ro_hid = act(dot(n_out, W("wro", dlast, lhid)) + bias(B_RO1, lhid))
    o_ref[...] = dot(ro_hid, W("wro2", lhid, LANE)) + bias(B_RO2, LANE)


# --------------------------------------------------------------------------- #
# Host-side weight packing into ONE slab (done once, outside the jitted step).
# --------------------------------------------------------------------------- #
def pack_kernel_params(params, dims):
    f32 = jnp.float32
    H, dout = dims["dim_lstm_out"], dims["dim_out"]
    rfm = dims["rfm_hidden_dim"]

    widths = [dims["hidden_dim"], dims["dim_mid"], dout, dims["dim_last"],
              rfm, dims["last_hidden"], dims["act_dims"], H]
    assert max(widths) <= LANE, "packing scheme assumes every feature width <= 128"

    g = params["gru"]

    def gate_block_w(w_r, w_z, w_n):
        w = jnp.zeros((w_r.shape[0], W_SLAB), f32)
        w = w.at[:, 0:H].set(w_r)
        w = w.at[:, LANE:LANE + H].set(w_z)
        w = w.at[:, 2 * LANE:2 * LANE + H].set(w_n)
        return w

    def gate_block_b(b_r, b_z, b_n):
        b = jnp.zeros((W_SLAB,), f32)
        b = b.at[0:H].set(b_r)
        b = b.at[LANE:LANE + H].set(b_z)
        b = b.at[2 * LANE:2 * LANE + H].set(b_n)
        return b

    def row(v):
        return jnp.zeros((W_SLAB,), f32).at[:v.shape[0]].set(v)

    biases = jnp.stack([
        row(params["b_mlp1a"]), row(params["b_mlp1b"]),
        gate_block_b(g["bir"], g["biz"], g["bin"]),
        gate_block_b(g["bhr"], g["bhz"], g["bhn"]),
        row(params["b_mlp1"]),
        row(params["b_fc_edge"]), row(params["b_fc_edge2"]),
        row(params["b_fc_node"]), row(params["b_fc_node2"]),
        row(params["b_ro"]), row(params["b_ro2"]),
    ])  # [N_BIAS_ROWS, 3*LANE]

    # fc_edge src/dst halves fused lane-blocked; fc_node split; readout2 lane-padded.
    we_fused = jnp.zeros((dout, 2 * LANE), f32)
    we_fused = we_fused.at[:, :rfm].set(params["w_fc_edge"][:dout])
    we_fused = we_fused.at[:, LANE:LANE + rfm].set(params["w_fc_edge"][dout:])
    wn_nf = params["w_fc_node"][:dout]
    wn_h = params["w_fc_node"][dout:]
    act_dims = params["w_ro2"].shape[1]
    w_ro2_pad = (jnp.zeros((params["w_ro2"].shape[0], LANE), f32)
                 .at[:, :act_dims].set(params["w_ro2"]))

    blocks = [
        ("biases", biases),
        ("w1a", params["w_mlp1a"]), ("w1b", params["w_mlp1b"]),
        ("wi", gate_block_w(g["wir"], g["wiz"], g["win"])),
        ("wh", gate_block_w(g["whr"], g["whz"], g["whn"])),
        ("wm1", params["w_mlp1"]),
        ("we", we_fused), ("we2", params["w_fc_edge2"]),
        ("wn_nf", wn_nf), ("wn_h", wn_h), ("wn2", params["w_fc_node2"]),
        ("wro", params["w_ro"]), ("wro2", w_ro2_pad),
    ]

    offs, parts, cur = {}, [], 0
    for name, mat in blocks:
        r, c = mat.shape
        assert c <= W_SLAB, f"{name} wider than slab"
        rpad = -(-r // 8) * 8                      # 8-aligned row offsets
        parts.append(jnp.zeros((rpad, W_SLAB), f32).at[:r, :c].set(mat))
        offs[name] = cur
        cur += rpad
    slab = jnp.concatenate(parts, axis=0)          # [rows(mult of 8), 384]
    return slab, offs


# --------------------------------------------------------------------------- #
# OppoModelNet.forward (wrapper around the single fused pallas_call)
# --------------------------------------------------------------------------- #
def oppo_model_forward(slab, obs, hidden_n, src_idx, dst_idx, *, dims, offs,
                       act_kind=ARGS["act_func"], use_bf16=False):
    N = obs.shape[0]
    H = dims["dim_lstm_out"]
    N_pad = -(-N // 8) * 8                         # full-sublane node dim

    obs_pad = jnp.zeros((N_pad, obs.shape[1]), jnp.float32).at[:N].set(obs)
    h0_pad = jnp.zeros((N_pad, LANE), jnp.float32).at[:N, :H].set(hidden_n[0])
    idx_rc = jnp.stack([src_idx, dst_idx], axis=0).astype(jnp.int32)   # [2, E]
    idx_cc = jnp.stack([src_idx, dst_idx], axis=1).astype(jnp.int32)   # [E, 2]

    out_pad, h_out_pad = pl.pallas_call(
        functools.partial(_fused_forward_kernel, dims=dims, offs=offs,
                          act_kind=act_kind, use_bf16=use_bf16),
        out_shape=(jax.ShapeDtypeStruct((N_pad, LANE), jnp.float32),
                   jax.ShapeDtypeStruct((N_pad, LANE), jnp.float32)),
        in_specs=[_VMEM] * 5,
        out_specs=(_VMEM, _VMEM),
        input_output_aliases={1: 1},               # recurrent state in-place
    )(obs_pad, h0_pad, idx_rc, idx_cc, slab)

    return out_pad[:N, :dims["act_dims"]], h_out_pad[:N, :H][None]


# --------------------------------------------------------------------------- #
# Pure-JAX reference (same math, high precision) for a sanity check.
# --------------------------------------------------------------------------- #
def reference_forward(params, obs, hidden_n, src_idx, dst_idx,
                      act_kind=ARGS["act_func"]):
    dot = lambda a, b: jnp.dot(a, b, precision=jax.lax.Precision.HIGHEST)
    act = lambda v: _act(v, act_kind)
    x = dot(act(dot(obs, params["w_mlp1a"]) + params["b_mlp1a"]),
            params["w_mlp1b"]) + params["b_mlp1b"]
    g, h = params["gru"], hidden_n[0]
    r = jax.nn.sigmoid(dot(x, g["wir"]) + g["bir"] + dot(h, g["whr"]) + g["bhr"])
    z = jax.nn.sigmoid(dot(x, g["wiz"]) + g["biz"] + dot(h, g["whz"]) + g["bhz"])
    n = jnp.tanh(dot(x, g["win"]) + g["bin"] + r * (dot(h, g["whn"]) + g["bhn"]))
    h_new = (1.0 - z) * n + z * h
    node_feat = dot(act(h_new), params["w_mlp1"]) + params["b_mlp1"]
    edge_inp = jnp.concatenate([node_feat[src_idx], node_feat[dst_idx]], axis=-1)
    e_feat = dot(act(dot(edge_inp, params["w_fc_edge"]) + params["b_fc_edge"]),
                 params["w_fc_edge2"]) + params["b_fc_edge2"]
    h_msg = jnp.zeros((node_feat.shape[0], e_feat.shape[1]),
                      jnp.float32).at[dst_idx].add(e_feat)
    node_inp = jnp.concatenate([node_feat, h_msg], axis=-1)
    n_out = dot(jnp.maximum(dot(node_inp, params["w_fc_node"]) + params["b_fc_node"], 0.0),
                params["w_fc_node2"]) + params["b_fc_node2"]
    out = dot(act(dot(n_out, params["w_ro"]) + params["b_ro"]),
              params["w_ro2"]) + params["b_ro2"]
    return out, h_new[None]


# --------------------------------------------------------------------------- #
# Deterministic parameter construction (shapes follow the module __init__).
# --------------------------------------------------------------------------- #
def init_params(key, *, dim_in_node, dim_in_u, hidden_dim, dim_lstm_out,
                dim_mid, dim_out, act_dims, dim_last, rfm_hidden_dim, last_hidden):
    keys = iter(jax.random.split(key, 64))

    def linear(din, dout, scale=0.1):
        w = scale * jax.random.normal(next(keys), (din, dout), jnp.float32)
        b = scale * jax.random.normal(next(keys), (dout,), jnp.float32)
        return w, b

    p = {}
    obs_dim = dim_in_node + dim_in_u
    p["w_mlp1a"], p["b_mlp1a"] = linear(obs_dim, hidden_dim)
    p["w_mlp1b"], p["b_mlp1b"] = linear(hidden_dim, dim_mid)
    p["w_mlp1"], p["b_mlp1"] = linear(dim_lstm_out, dim_out)
    p["w_ro"], p["b_ro"] = linear(dim_last, last_hidden)
    p["w_ro2"], p["b_ro2"] = linear(last_hidden, act_dims)

    # GRU(dim_mid -> dim_lstm_out), gates r/z/n (PyTorch order)
    gru = {}
    for gate in ("r", "z", "n"):
        gru[f"wi{gate}"], gru[f"bi{gate}"] = linear(dim_mid, dim_lstm_out)
        gru[f"wh{gate}"], gru[f"bh{gate}"] = linear(dim_lstm_out, dim_lstm_out)
    p["gru"] = gru

    # RFMBlock(dim_last + dim_out, 2*dim_out, 2*dim_last, rfm_hidden_dim, dim_last)
    p["w_fc_edge"], p["b_fc_edge"] = linear(2 * dim_out, rfm_hidden_dim)
    p["w_fc_edge2"], p["b_fc_edge2"] = linear(rfm_hidden_dim, dim_last)
    p["w_fc_node"], p["b_fc_node"] = linear(dim_last + dim_out, rfm_hidden_dim)
    p["w_fc_node2"], p["b_fc_node2"] = linear(rfm_hidden_dim, dim_last)
    # fc_u / fc_u2 exist in the module but their output is unused by forward().
    return p


if __name__ == "__main__":
    key = jax.random.PRNGKey(0)
    kp_, ko, kh = jax.random.split(key, 3)

    dims = dict(dim_in_node=6, dim_in_u=2, hidden_dim=16, dim_lstm_out=16,
                dim_mid=8, dim_out=8, act_dims=5, dim_last=8,
                rfm_hidden_dim=16, last_hidden=16)
    params = init_params(kp_, **dims)

    # Synthetic batched graph: 2 graphs, 3 nodes each, fully-connected directed
    # (no self loops) -> N = 6 nodes, E = 12 edges.
    B, npg = 2, 3
    src_list, dst_list = [], []
    for gidx in range(B):
        base = gidx * npg
        for i in range(npg):
            for j in range(npg):
                if i != j:
                    src_list.append(base + i)
                    dst_list.append(base + j)
    src_idx = jnp.array(src_list, dtype=jnp.int32)
    dst_idx = jnp.array(dst_list, dtype=jnp.int32)
    N = B * npg

    obs = jax.random.normal(ko, (N, dims["dim_in_node"] + dims["dim_in_u"]), jnp.float32)
    hidden_n = jax.random.normal(kh, (1, N, dims["dim_lstm_out"]), jnp.float32)

    # Pack weights ONCE (outside the per-step jit); offsets are static Python ints.
    slab, offs = pack_kernel_params(params, dims)
    slab = jax.device_put(slab)

    forward = jax.jit(functools.partial(oppo_model_forward, dims=dims, offs=offs))
    out, n_hid = forward(slab, obs, hidden_n, src_idx, dst_idx)
    jax.block_until_ready((out, n_hid))

    ref_out, ref_hid = reference_forward(params, obs, hidden_n, src_idx, dst_idx)
    assert out.shape == (N, dims["act_dims"]) and n_hid.shape == (1, N, dims["dim_lstm_out"])
    assert jnp.allclose(out, ref_out, atol=1e-2, rtol=1e-2)
    assert jnp.allclose(n_hid, ref_hid, atol=1e-2, rtol=1e-2)
    print("KERNEL_OK")
</pallas_src>

<mosaic_0001>
module attributes {stable_mosaic.version = 11 : i64} {
  func.func @_fused_forward_kernel(%arg0: memref<8x8xf32, #tpu.memory_space<vmem>>, %arg1: memref<8x128xf32, #tpu.memory_space<vmem>>, %arg2: memref<2x12xi32, #tpu.memory_space<vmem>>, %arg3: memref<12x2xi32, #tpu.memory_space<vmem>>, %arg4: memref<160x384xf32, #tpu.memory_space<vmem>>, %arg5: memref<8x128xf32, #tpu.memory_space<vmem>>, %arg6: memref<8x128xf32, #tpu.memory_space<vmem>>) attributes {dimension_semantics = [], scalar_prefetch = 0 : i64, scratch_operands = 0 : i64, tpu.core_type = #tpu.core_type<tc>} {
    %c0 = arith.constant 0 : index
    %c0_0 = arith.constant 0 : index
    %0 = vector.load %arg0[%c0, %c0_0] : memref<8x8xf32, #tpu.memory_space<vmem>>, vector<8x8xf32>
    %c16 = arith.constant 16 : index
    %c0_1 = arith.constant 0 : index
    %1 = vector.load %arg4[%c16, %c0_1] : memref<160x384xf32, #tpu.memory_space<vmem>>, vector<8x16xf32>
    %cst = arith.constant dense<0.000000e+00> : vector<8x16xf32>
    %2 = tpu.matmul %0, %1, %cst {dimension_numbers = #tpu.dot_dimension_numbers<[1], [0], [0], [1], [0, 0, 1, 1], [], []>} : vector<8x8xf32>, vector<8x16xf32>, vector<8x16xf32> -> vector<8x16xf32>
    %c0_2 = arith.constant 0 : index
    %c0_3 = arith.constant 0 : index
    %3 = vector.load %arg4[%c0_2, %c0_3] : memref<160x384xf32, #tpu.memory_space<vmem>>, vector<1x16xf32>
    %4 = vector.broadcast %3 : vector<1x16xf32> to vector<8x16xf32>
    %5 = arith.addf %2, %4 : vector<8x16xf32>
    %cst_4 = arith.constant 0.000000e+00 : f32
    %6 = vector.broadcast %cst_4 : f32 to vector<8x16xf32>
    %7 = arith.maximumf %5, %6 : vector<8x16xf32>
    %c24 = arith.constant 24 : index
    %c0_5 = arith.constant 0 : index
    %8 = vector.load %arg4[%c24, %c0_5] : memref<160x384xf32, #tpu.memory_space<vmem>>, vector<16x8xf32>
    %cst_6 = arith.constant dense<0.000000e+00> : vector<8x8xf32>
    %9 = tpu.matmul %7, %8, %cst_6 {dimension_numbers = #tpu.dot_dimension_numbers<[1], [0], [0], [1], [0, 0, 1, 1], [], []>} : vector<8x16xf32>, vector<16x8xf32>, vector<8x8xf32> -> vector<8x8xf32>
    %c1 = arith.constant 1 : index
    %c0_7 = arith.constant 0 : index
    %10 = vector.load %arg4[%c1, %c0_7] : memref<160x384xf32, #tpu.memory_space<vmem>>, vector<1x8xf32>
    %11 = vector.broadcast %10 : vector<1x8xf32> to vector<8x8xf32>
    %12 = arith.addf %9, %11 : vector<8x8xf32>
    %c0_8 = arith.constant 0 : index
    %c0_9 = arith.constant 0 : index
    %13 = vector.load %arg1[%c0_8, %c0_9] : memref<8x128xf32, #tpu.memory_space<vmem>>, vector<8x128xf32>
    %c40 = arith.constant 40 : index
    %c0_10 = arith.constant 0 : index
    %14 = vector.load %arg4[%c40, %c0_10] : memref<160x384xf32, #tpu.memory_space<vmem>>, vector<8x384xf32>
    %cst_11 = arith.constant dense<0.000000e+00> : vector<8x384xf32>
    %15 = tpu.matmul %12, %14, %cst_11 {dimension_numbers = #tpu.dot_dimension_numbers<[1], [0], [0], [1], [0, 0, 1, 1], [], []>} : vector<8x8xf32>, vector<8x384xf32>, vector<8x384xf32> -> vector<8x384xf32>
    %c2 = arith.constant 2 : index
    %c0_12 = arith.constant 0 : index
    %16 = vector.load %arg4[%c2, %c0_12] : memref<160x384xf32, #tpu.memory_space<vmem>>, vector<1x384xf32>
    %17 = vector.broadcast %16 : vector<1x384xf32> to vector<8x384xf32>
    %18 = arith.addf %15, %17 : vector<8x384xf32>
    %19 = vector.extract_strided_slice %13 {offsets = [0, 0], sizes = [8, 16], strides = [1, 1]} : vector<8x128xf32> to vector<8x16xf32>
    %c48 = arith.constant 48 : index
    %c0_13 = arith.constant 0 : index
    %20 = vector.load %arg4[%c48, %c0_13] : memref<160x384xf32, #tpu.memory_space<vmem>>, vector<16x384xf32>
    %cst_14 = arith.constant dense<0.000000e+00> : vector<8x384xf32>
    %21 = tpu.matmul %19, %20, %cst_14 {dimension_numbers = #tpu.dot_dimension_numbers<[1], [0], [0], [1], [0, 0, 1, 1], [], []>} : vector<8x16xf32>, vector<16x384xf32>, vector<8x384xf32> -> vector<8x384xf32>
    %c3 = arith.constant 3 : index
    %c0_15 = arith.constant 0 : index
    %22 = vector.load %arg4[%c3, %c0_15] : memref<160x384xf32, #tpu.memory_space<vmem>>, vector<1x384xf32>
    %23 = vector.broadcast %22 : vector<1x384xf32> to vector<8x384xf32>
    %24 = arith.addf %21, %23 : vector<8x384xf32>
    %25 = vector.extract_strided_slice %18 {offsets = [0, 0], sizes = [8, 128], strides = [1, 1]} : vector<8x384xf32> to vector<8x128xf32>
    %26 = vector.extract_strided_slice %24 {offsets = [0, 0], sizes = [8, 128], strides = [1, 1]} : vector<8x384xf32> to vector<8x128xf32>
    %27 = arith.addf %25, %26 : vector<8x128xf32>
    %28 = arith.negf %27 : vector<8x128xf32>
    %29 = math.exp %28 : vector<8x128xf32>
    %cst_16 = arith.constant 1.000000e+00 : f32
    %30 = vector.broadcast %cst_16 : f32 to vector<8x128xf32>
    %31 = arith.addf %30, %29 : vector<8x128xf32>
    %32 = arith.divf %30, %31 : vector<8x128xf32>
    %33 = vector.extract_strided_slice %18 {offsets = [0, 128], sizes = [8, 128], strides = [1, 1]} : vector<8x384xf32> to vector<8x128xf32>
    %34 = vector.extract_strided_slice %24 {offsets = [0, 128], sizes = [8, 128], strides = [1, 1]} : vector<8x384xf32> to vector<8x128xf32>
    %35 = arith.addf %33, %34 : vector<8x128xf32>
    %36 = arith.negf %35 : vector<8x128xf32>
    %37 = math.exp %36 : vector<8x128xf32>
    %cst_17 = arith.constant 1.000000e+00 : f32
    %38 = vector.broadcast %cst_17 : f32 to vector<8x128xf32>
    %39 = arith.addf %38, %37 : vector<8x128xf32>
    %40 = arith.divf %38, %39 : vector<8x128xf32>
    %41 = vector.extract_strided_slice %18 {offsets = [0, 256], sizes = [8, 128], strides = [1, 1]} : vector<8x384xf32> to vector<8x128xf32>
    %42 = vector.extract_strided_slice %24 {offsets = [0, 256], sizes = [8, 128], strides = [1, 1]} : vector<8x384xf32> to vector<8x128xf32>
    %43 = arith.mulf %32, %42 : vector<8x128xf32>
    %44 = arith.addf %41, %43 : vector<8x128xf32>
    %45 = math.tanh %44 : vector<8x128xf32>
    %cst_18 = arith.constant 1.000000e+00 : f32
    %46 = vector.broadcast %cst_18 : f32 to vector<8x128xf32>
    %47 = arith.subf %46, %40 : vector<8x128xf32>
    %48 = arith.mulf %47, %45 : vector<8x128xf32>
    %49 = arith.mulf %40, %13 : vector<8x128xf32>
    %50 = arith.addf %48, %49 : vector<8x128xf32>
    %c0_19 = arith.constant 0 : index
    %c0_20 = arith.constant 0 : index
    %51 = vector.load %arg6[%c0_19, %c0_20] : memref<8x128xf32, #tpu.memory_space<vmem>>, vector<8x128xf32>
    tpu.vector_store %arg6[%c0_19, %c0_20], %50 {strides = array<i32>} : memref<8x128xf32, #tpu.memory_space<vmem>>, vector<8x128xf32>,
    %52 = vector.extract_strided_slice %50 {offsets = [0, 0], sizes = [8, 16], strides = [1, 1]} : vector<8x128xf32> to vector<8x16xf32>
    %cst_21 = arith.constant 0.000000e+00 : f32
    %53 = vector.broadcast %cst_21 : f32 to vector<8x16xf32>
    %54 = arith.maximumf %52, %53 : vector<8x16xf32>
    %c64 = arith.constant 64 : index
    %c0_22 = arith.constant 0 : index
    %55 = vector.load %arg4[%c64, %c0_22] : memref<160x384xf32, #tpu.memory_space<vmem>>, vector<16x8xf32>
    %cst_23 = arith.constant dense<0.000000e+00> : vector<8x8xf32>
    %56 = tpu.matmul %54, %55, %cst_23 {dimension_numbers = #tpu.dot_dimension_numbers<[1], [0], [0], [1], [0, 0, 1, 1], [], []>} : vector<8x16xf32>, vector<16x8xf32>, vector<8x8xf32> -> vector<8x8xf32>
    %c4 = arith.constant 4 : index
    %c0_24 = arith.constant 0 : index
    %57 = vector.load %arg4[%c4, %c0_24] : memref<160x384xf32, #tpu.memory_space<vmem>>, vector<1x8xf32>
    %58 = vector.broadcast %57 : vector<1x8xf32> to vector<8x8xf32>
    %59 = arith.addf %56, %58 : vector<8x8xf32>
    %c80 = arith.constant 80 : index
    %c0_25 = arith.constant 0 : index
    %60 = vector.load %arg4[%c80, %c0_25] : memref<160x384xf32, #tpu.memory_space<vmem>>, vector<8x256xf32>
    %cst_26 = arith.constant dense<0.000000e+00> : vector<8x256xf32>
    %61 = tpu.matmul %59, %60, %cst_26 {dimension_numbers = #tpu.dot_dimension_numbers<[1], [0], [0], [1], [0, 0, 1, 1], [], []>} : vector<8x8xf32>, vector<8x256xf32>, vector<8x256xf32> -> vector<8x256xf32>
    %62 = tpu.iota {dimensions = array<i32: 1>} : vector<12x8xi32>
    %c0_27 = arith.constant 0 : index
    %c0_28 = arith.constant 0 : index
    %63 = vector.load %arg3[%c0_27, %c0_28] : memref<12x2xi32, #tpu.memory_space<vmem>>, vector<12x1xi32>
    %64 = vector.broadcast %63 : vector<12x1xi32> to vector<12x8xi32>
    %65 = arith.cmpi eq, %62, %64 : vector<12x8xi32>
    %66 = arith.extui %65 : vector<12x8xi1> to vector<12x8xi32>
    %67 = arith.sitofp %66 : vector<12x8xi32> to vector<12x8xf32>
    %c0_29 = arith.constant 0 : index
    %c1_30 = arith.constant 1 : index
    %68 = vector.load %arg3[%c0_29, %c1_30] : memref<12x2xi32, #tpu.memory_space<vmem>>, vector<12x1xi32>
    %69 = vector.broadcast %68 : vector<12x1xi32> to vector<12x8xi32>
    %70 = arith.cmpi eq, %62, %69 : vector<12x8xi32>
    %71 = arith.extui %70 : vector<12x8xi1> to vector<12x8xi32>
    %72 = arith.sitofp %71 : vector<12x8xi32> to vector<12x8xf32>
    %73 = vector.extract_strided_slice %61 {offsets = [0, 0], sizes = [8, 16], strides = [1, 1]} : vector<8x256xf32> to vector<8x16xf32>
    %cst_31 = arith.constant dense<0.000000e+00> : vector<12x16xf32>
    %74 = tpu.matmul %67, %73, %cst_31 {dimension_numbers = #tpu.dot_dimension_numbers<[1], [0], [0], [1], [0, 0, 1, 1], [], []>} : vector<12x8xf32>, vector<8x16xf32>, vector<12x16xf32> -> vector<12x16xf32>
    %75 = vector.extract_strided_slice %61 {offsets = [0, 128], sizes = [8, 16], strides = [1, 1]} : vector<8x256xf32> to vector<8x16xf32>
    %cst_32 = arith.constant dense<0.000000e+00> : vector<12x16xf32>
    %76 = tpu.matmul %72, %75, %cst_32 {dimension_numbers = #tpu.dot_dimension_numbers<[1], [0], [0], [1], [0, 0, 1, 1], [], []>} : vector<12x8xf32>, vector<8x16xf32>, vector<12x16xf32> -> vector<12x16xf32>
    %77 = arith.addf %74, %76 : vector<12x16xf32>
    %c5 = arith.constant 5 : index
    %c0_33 = arith.constant 0 : index
    %78 = vector.load %arg4[%c5, %c0_33] : memref<160x384xf32, #tpu.memory_space<vmem>>, vector<1x16xf32>
    %79 = vector.broadcast %78 : vector<1x16xf32> to vector<12x16xf32>
    %80 = arith.addf %77, %79 : vector<12x16xf32>
    %cst_34 = arith.constant 0.000000e+00 : f32
    %81 = vector.broadcast %cst_34 : f32 to vector<12x16xf32>
    %82 = arith.maximumf %80, %81 : vector<12x16xf32>
    %c88 = arith.constant 88 : index
    %c0_35 = arith.constant 0 : index
    %83 = vector.load %arg4[%c88, %c0_35] : memref<160x384xf32, #tpu.memory_space<vmem>>, vector<16x8xf32>
    %cst_36 = arith.constant dense<0.000000e+00> : vector<12x8xf32>
    %84 = tpu.matmul %82, %83, %cst_36 {dimension_numbers = #tpu.dot_dimension_numbers<[1], [0], [0], [1], [0, 0, 1, 1], [], []>} : vector<12x16xf32>, vector<16x8xf32>, vector<12x8xf32> -> vector<12x8xf32>
    %c6 = arith.constant 6 : index
    %c0_37 = arith.constant 0 : index
    %85 = vector.load %arg4[%c6, %c0_37] : memref<160x384xf32, #tpu.memory_space<vmem>>, vector<1x8xf32>
    %86 = vector.broadcast %85 : vector<1x8xf32> to vector<12x8xf32>
    %87 = arith.addf %84, %86 : vector<12x8xf32>
    %88 = tpu.iota {dimensions = array<i32: 0>} : vector<8x12xi32>
    %c1_38 = arith.constant 1 : index
    %c0_39 = arith.constant 0 : index
    %89 = vector.load %arg2[%c1_38, %c0_39] : memref<2x12xi32, #tpu.memory_space<vmem>>, vector<1x12xi32>
    %90 = vector.broadcast %89 : vector<1x12xi32> to vector<8x12xi32>
    %91 = arith.cmpi eq, %88, %90 : vector<8x12xi32>
    %92 = arith.extui %91 : vector<8x12xi1> to vector<8x12xi32>
    %93 = arith.sitofp %92 : vector<8x12xi32> to vector<8x12xf32>
    %cst_40 = arith.constant dense<0.000000e+00> : vector<8x8xf32>
    %94 = tpu.matmul %93, %87, %cst_40 {dimension_numbers = #tpu.dot_dimension_numbers<[1], [0], [0], [1], [0, 0, 1, 1], [], []>} : vector<8x12xf32>, vector<12x8xf32>, vector<8x8xf32> -> vector<8x8xf32>
    %c104 = arith.constant 104 : index
    %c0_41 = arith.constant 0 : index
    %95 = vector.load %arg4[%c104, %c0_41] : memref<160x384xf32, #tpu.memory_space<vmem>>, vector<8x16xf32>
    %cst_42 = arith.constant dense<0.000000e+00> : vector<8x16xf32>
    %96 = tpu.matmul %59, %95, %cst_42 {dimension_numbers = #tpu.dot_dimension_numbers<[1], [0], [0], [1], [0, 0, 1, 1], [], []>} : vector<8x8xf32>, vector<8x16xf32>, vector<8x16xf32> -> vector<8x16xf32>
    %c112 = arith.constant 112 : index
    %c0_43 = arith.constant 0 : index
    %97 = vector.load %arg4[%c112, %c0_43] : memref<160x384xf32, #tpu.memory_space<vmem>>, vector<8x16xf32>
    %cst_44 = arith.constant dense<0.000000e+00> : vector<8x16xf32>
    %98 = tpu.matmul %94, %97, %cst_44 {dimension_numbers = #tpu.dot_dimension_numbers<[1], [0], [0], [1], [0, 0, 1, 1], [], []>} : vector<8x8xf32>, vector<8x16xf32>, vector<8x16xf32> -> vector<8x16xf32>
    %99 = arith.addf %96, %98 : vector<8x16xf32>
    %c7 = arith.constant 7 : index
    %c0_45 = arith.constant 0 : index
    %100 = vector.load %arg4[%c7, %c0_45] : memref<160x384xf32, #tpu.memory_space<vmem>>, vector<1x16xf32>
    %101 = vector.broadcast %100 : vector<1x16xf32> to vector<8x16xf32>
    %102 = arith.addf %99, %101 : vector<8x16xf32>
    %cst_46 = arith.constant 0.000000e+00 : f32
    %103 = vector.broadcast %cst_46 : f32 to vector<8x16xf32>
    %104 = arith.maximumf %102, %103 : vector<8x16xf32>
    %c120 = arith.constant 120 : index
    %c0_47 = arith.constant 0 : index
    %105 = vector.load %arg4[%c120, %c0_47] : memref<160x384xf32, #tpu.memory_space<vmem>>, vector<16x8xf32>
    %cst_48 = arith.constant dense<0.000000e+00> : vector<8x8xf32>
    %106 = tpu.matmul %104, %105, %cst_48 {dimension_numbers = #tpu.dot_dimension_numbers<[1], [0], [0], [1], [0, 0, 1, 1], [], []>} : vector<8x16xf32>, vector<16x8xf32>, vector<8x8xf32> -> vector<8x8xf32>
    %c8 = arith.constant 8 : index
    %c0_49 = arith.constant 0 : index
    %107 = vector.load %arg4[%c8, %c0_49] : memref<160x384xf32, #tpu.memory_space<vmem>>, vector<1x8xf32>
    %108 = vector.broadcast %107 : vector<1x8xf32> to vector<8x8xf32>
    %109 = arith.addf %106, %108 : vector<8x8xf32>
    %c136 = arith.constant 136 : index
    %c0_50 = arith.constant 0 : index
    %110 = vector.load %arg4[%c136, %c0_50] : memref<160x384xf32, #tpu.memory_space<vmem>>, vector<8x16xf32>
    %cst_51 = arith.constant dense<0.000000e+00> : vector<8x16xf32>
    %111 = tpu.matmul %109, %110, %cst_51 {dimension_numbers = #tpu.dot_dimension_numbers<[1], [0], [0], [1], [0, 0, 1, 1], [], []>} : vector<8x8xf32>, vector<8x16xf32>, vector<8x16xf32> -> vector<8x16xf32>
    %c9 = arith.constant 9 : index
    %c0_52 = arith.constant 0 : index
    %112 = vector.load %arg4[%c9, %c0_52] : memref<160x384xf32, #tpu.memory_space<vmem>>, vector<1x16xf32>
    %113 = vector.broadcast %112 : vector<1x16xf32> to vector<8x16xf32>
    %114 = arith.addf %111, %113 : vector<8x16xf32>
    %cst_53 = arith.constant 0.000000e+00 : f32
    %115 = vector.broadcast %cst_53 : f32 to vector<8x16xf32>
    %116 = arith.maximumf %114, %115 : vector<8x16xf32>
    %c144 = arith.constant 144 : index
    %c0_54 = arith.constant 0 : index
    %117 = vector.load %arg4[%c144, %c0_54] : memref<160x384xf32, #tpu.memory_space<vmem>>, vector<16x128xf32>
    %cst_55 = arith.constant dense<0.000000e+00> : vector<8x128xf32>
    %118 = tpu.matmul %116, %117, %cst_55 {dimension_numbers = #tpu.dot_dimension_numbers<[1], [0], [0], [1], [0, 0, 1, 1], [], []>} : vector<8x16xf32>, vector<16x128xf32>, vector<8x128xf32> -> vector<8x128xf32>
    %c10 = arith.constant 10 : index
    %c0_56 = arith.constant 0 : index
    %119 = vector.load %arg4[%c10, %c0_56] : memref<160x384xf32, #tpu.memory_space<vmem>>, vector<1x128xf32>
    %120 = vector.broadcast %119 : vector<1x128xf32> to vector<8x128xf32>
    %121 = arith.addf %118, %120 : vector<8x128xf32>
    %c0_57 = arith.constant 0 : index
    %c0_58 = arith.constant 0 : index
    %122 = vector.load %arg5[%c0_57, %c0_58] : memref<8x128xf32, #tpu.memory_space<vmem>>, vector<8x128xf32>
    tpu.vector_store %arg5[%c0_57, %c0_58], %121 {strides = array<i32>} : memref<8x128xf32, #tpu.memory_space<vmem>>, vector<8x128xf32>,
    return
  }
}

</mosaic_0001>

<llo_original>
// kernel: oppo_model_forward.1
$region0: #{oppo_model_forward.1}
  #allocation0 [shape = 'u32[]', space=smem, size = 0x4, offset = 0x4, fixed_abs, tag = 'smem constant byte address 0x4 - core index']
  #allocation1 [shape = 'u32[144,128]{1,0:T(1,128)}', space=vmem, size = 0x12000, scoped, tag = 'internal scratch']
  %s0 = inlined_call_operand.vmem [shape: f32[8,8], index: 0, kind: input, shape index: {}]
  %s1 = inlined_call_operand.vmem [shape: f32[8,128], index: 1, kind: input, shape index: {}, may-alias: {1,6}]
  %s2 = inlined_call_operand.vmem [shape: s32[2,12], index: 2, kind: input, shape index: {}]
  %s3 = inlined_call_operand.vmem [shape: s32[12,2], index: 3, kind: input, shape index: {}]
  %s4 = inlined_call_operand.hbm [shape: f32[160,384], index: 4, kind: input, shape index: {}]
  %s5 = inlined_call_operand.hbm [shape: f32[8,128], index: 5, kind: output, shape index: {0}]
  %s6 = inlined_call_operand.vmem [shape: f32[8,128], index: 6, kind: output, shape index: {1}, may-alias: {1,6}]
  %7 = xla_tuple %s5, %s6
  %s8 = sld [smem:[#allocation0]]
  $region42: #{oppo_model_forward.1} parent=0
    _
  %s10 = ssub.s32 1, %s8
  %s11 = scalar_select 0, %s10, %s8
  $region1: #{oppo_model_forward.1} parent=0
    #allocation2 [shape = 'u8[245760]{0}', space=vmem, size = 0x3c000, scoped, tag = 'input window, operand 4, single buffered']
    #allocation3 [shape = 's32[1]{0}', space=sflag, size = 0x4, scoped, tag = 'scoped memory for oppo_model_forward.1']
    #allocation4 [shape = 's32[1]{0}', space=sflag, size = 0x4, scoped, tag = 'scoped memory for oppo_model_forward.1']
    #allocation5 [shape = 'u8[4096]{0}', space=vmem, size = 0x1000, scoped, tag = 'output window, operand 0, single buffered']
    %12 = vsyncpa [#allocation3], 0
    %13 = vsyncpa [#allocation4], 0
    // Predicated region
    $region2: #{oppo_model_forward.1} parent=1 // pred_check
      _
    $region3: #{oppo_model_forward.1} parent=1 // pred_check_branch
      %15 = sbr.rel (0) target = $region5
    $region4: #{oppo_model_forward.1} parent=1 // pred_region
      _
    $region5: #{oppo_model_forward.1} parent=1 // pred_fallthru
      _
    // Predicated region
    $region6: #{oppo_model_forward.1} parent=1 // pred_check
      _
    $region7: #{oppo_model_forward.1} parent=1 // pred_check_branch
      %17 = sbr.rel (0) target = $region9
    $region8: #{oppo_model_forward.1} parent=1 // pred_region
      _
    $region9: #{oppo_model_forward.1} parent=1 // pred_fallthru
      _
    // Predicated region
    $region10: #{oppo_model_forward.1} parent=1 // pred_check
      _
    $region11: #{oppo_model_forward.1} parent=1 // pred_check_branch
      %19 = sbr.rel (0) target = $region13
    $region12: #{oppo_model_forward.1} parent=1 // pred_region
      _
    $region13: #{oppo_model_forward.1} parent=1 // pred_fallthru
      _
    // Predicated region
    $region14: #{oppo_model_forward.1} parent=1 // pred_check
      _
    $region15: #{oppo_model_forward.1} parent=1 // pred_check_branch
      %21 = sbr.rel (0) target = $region17
    $region16: #{oppo_model_forward.1} parent=1 // pred_region
      _
    $region17: #{oppo_model_forward.1} parent=1 // pred_fallthru
      _
    // Predicated region
    $region18: #{oppo_model_forward.1} parent=1 // pred_check
      _
    $region19: #{oppo_model_forward.1} parent=1 // pred_check_branch
      %23 = sbr.rel (0) target = $region21
    $region20: #{oppo_model_forward.1} parent=1 // pred_region
      %s25 = ssub.s32 7680, 7680
      %26 = vsyncadd [#allocation3], %s25
      %s27 = sshll.u32 [#allocation2], 4
      %s28 = int_to_ptr.vmem [resolvable:$true] %s27
      %33 = dma.hbm_to_vmem [thread:$0]  %s4, 7680, %s28, [#allocation3], 384, 384, 24
    $region21: #{oppo_model_forward.1} parent=1 // pred_fallthru
      _
    // Predicated region
    $region22: #{oppo_model_forward.1} parent=1 // pred_check
      _
    $region23: #{oppo_model_forward.1} parent=1 // pred_check_branch
      %35 = sbr.rel (0) target = $region25
    $region24: #{oppo_model_forward.1} parent=1 // pred_region
      %36 = dma.done [#allocation3], 7680
    $region25: #{oppo_model_forward.1} parent=1 // pred_fallthru
      _
    %v37 = vld [vmem:[%s0] sm:$0xff]
    %v38 = vld [vmem:[#allocation2 + $0x30] sm:$0xff]
    %v39 = vld [vmem:[#allocation2] ss:$0 sm:$0xff]
    %vm40 = vcmask 64512
    %v42 = vsel %vm40, %v37, 0
    %44 = vmatprep.subr.mxu0 0.0
    %45 = vmatpush1.msra.mxu0 %v38
    %46 = vmatprep.subr.mxu0 0.0
    %47 = vmatpush1.msra.mxu0 0.0
    %48 = vmatprep.subr.mxu0 0.0
    %49 = vmatpush1.msra.mxu0 0.0
    %50 = vmatprep.subr.mxu0 0.0
    %51 = vmatpush1.msra.mxu0 0.0
    %52 = vmatprep.subr.mxu0 0.0
    %53 = vmatpush1.msra.mxu0 0.0
    %54 = vmatprep.subr.mxu0 0.0
    %55 = vmatpush1.msra.mxu0 0.0
    %56 = vmatprep.subr.mxu0 0.0
    %57 = vmatpush1.msra.mxu0 0.0
    %58 = vmatprep.subr.mxu0 0.0
    %59 = vmatpush1.msra.mxu0 0.0
    %60 = vmatprep.subr.mxu0 0.0
    %61 = vmatpush1.msra.mxu0 0.0
    %62 = vmatprep.subr.mxu0 0.0
    %63 = vmatpush1.msra.mxu0 0.0
    %64 = vmatprep.subr.mxu0 0.0
    %65 = vmatpush1.msra.mxu0 0.0
    %66 = vmatprep.subr.mxu0 0.0
    %67 = vmatpush1.msra.mxu0 0.0
    %68 = vmatprep.subr.mxu0 0.0
    %69 = vmatpush1.msra.mxu0 0.0
    %70 = vmatprep.subr.mxu0 0.0
    %71 = vmatpush1.msra.mxu0 0.0
    %72 = vmatprep.subr.mxu0 0.0
    %73 = vmatpush1.msra.mxu0 0.0
    %74 = vmatprep.subr.mxu0 0.0
    %75 = vmatpush1.msra.mxu0 0.0
    %76 = vmatprep.subr.mxu0 0.0
    %77 = vmatpush1.msra.mxu0 0.0
    %78 = vmatprep.subr.mxu0 0.0
    %79 = vmatpush1.msra.mxu0 0.0
    %80 = vmatprep.subr.mxu0 0.0
    %81 = vmatpush1.msra.mxu0 0.0
    %82 = vmatprep.subr.mxu0 0.0
    %83 = vmatpush1.msra.mxu0 0.0
    %84 = vmatprep.subr.mxu0 0.0
    %85 = vmatpush1.msra.mxu0 0.0
    %86 = vmatprep.subr.mxu0 0.0
    %87 = vmatpush1.msra.mxu0 0.0
    %88 = vmatprep.subr.mxu0 0.0
    %89 = vmatpush1.msra.mxu0 0.0
    %90 = vmatprep.subr.mxu0 0.0
    %91 = vmatpush1.msra.mxu0 0.0
    %92 = vmatprep.subr.mxu0 0.0
    %93 = vmatpush1.msra.mxu0 0.0
    %94 = vmatprep.subr.mxu0 0.0
    %95 = vmatpush1.msra.mxu0 0.0
    %96 = vmatprep.subr.mxu0 0.0
    %97 = vmatpush1.msra.mxu0 0.0
    %98 = vmatprep.subr.mxu0 0.0
    %99 = vmatpush1.msra.mxu0 0.0
    %100 = vmatprep.subr.mxu0 0.0
    %101 = vmatpush1.msra.mxu0 0.0
    %102 = vmatprep.subr.mxu0 0.0
    %103 = vmatpush1.msra.mxu0 0.0
    %104 = vmatprep.subr.mxu0 0.0
    %105 = vmatpush1.msra.mxu0 0.0
    %106 = vmatprep.subr.mxu0 0.0
    %107 = vmatpush1.msra.mxu0 0.0
    %108 = vmatprep.mubr.f32.mxu0 0.0
    %109 = vmatmul.mubr.f32.gmra.mrb[0].mxu0 %v42
    %v110 = vpop.f32.mrb[0].mxu0
    %v111 = vadd.f32 %v39, %v110
    %v112 = vpop.f32.mrb[0].mxu0
    %113 = vdwg.mxu0
    %v114 = vmax.f32 %v111, 0.0
    %v115 = vld [vmem:[#allocation2 + $0x48] sm:$0xff]
    %v116 = vld [vmem:[#allocation2 + $0x60] sm:$0xff]
    %v117 = vld [vmem:[#allocation2 + $0x1] ss:$0 sm:$0xff]
    %vm118 = vcmask 130048
    %v120 = vsel %vm118, %v114, 0
    %122 = vmatprep.subr.mxu0 0.0
    %123 = vmatpush1.msra.mxu0 %v115
    %124 = vmatprep.subr.mxu0 0.0
    %125 = vmatpush1.msra.mxu0 %v116
    %126 = vmatprep.subr.mxu0 0.0
    %127 = vmatpush1.msra.mxu0 0.0
    %128 = vmatprep.subr.mxu0 0.0
    %129 = vmatpush1.msra.mxu0 0.0
    %130 = vmatprep.subr.mxu0 0.0
    %131 = vmatpush1.msra.mxu0 0.0
    %132 = vmatprep.subr.mxu0 0.0
    %133 = vmatpush1.msra.mxu0 0.0
    %134 = vmatprep.subr.mxu0 0.0
    %135 = vmatpush1.msra.mxu0 0.0
    %136 = vmatprep.subr.mxu0 0.0
    %137 = vmatpush1.msra.mxu0 0.0
    %138 = vmatprep.subr.mxu0 0.0
    %139 = vmatpush1.msra.mxu0 0.0
    %140 = vmatprep.subr.mxu0 0.0
    %141 = vmatpush1.msra.mxu0 0.0
    %142 = vmatprep.subr.mxu0 0.0
    %143 = vmatpush1.msra.mxu0 0.0
    %144 = vmatprep.subr.mxu0 0.0
    %145 = vmatpush1.msra.mxu0 0.0
    %146 = vmatprep.subr.mxu0 0.0
    %147 = vmatpush1.msra.mxu0 0.0
    %148 = vmatprep.subr.mxu0 0.0
    %149 = vmatpush1.msra.mxu0 0.0
    %150 = vmatprep.subr.mxu0 0.0
    %151 = vmatpush1.msra.mxu0 0.0
    %152 = vmatprep.subr.mxu0 0.0
    %153 = vmatpush1.msra.mxu0 0.0
    %154 = vmatprep.subr.mxu0 0.0
    %155 = vmatpush1.msra.mxu0 0.0
    %156 = vmatprep.subr.mxu0 0.0
    %157 = vmatpush1.msra.mxu0 0.0
    %158 = vmatprep.subr.mxu0 0.0
    %159 = vmatpush1.msra.mxu0 0.0
    %160 = vmatprep.subr.mxu0 0.0
    %161 = vmatpush1.msra.mxu0 0.0
    %162 = vmatprep.subr.mxu0 0.0
    %163 = vmatpush1.msra.mxu0 0.0
    %164 = vmatprep.subr.mxu0 0.0
    %165 = vmatpush1.msra.mxu0 0.0
    %166 = vmatprep.subr.mxu0 0.0
    %167 = vmatpush1.msra.mxu0 0.0
    %168 = vmatprep.subr.mxu0 0.0
    %169 = vmatpush1.msra.mxu0 0.0
    %170 = vmatprep.subr.mxu0 0.0
    %171 = vmatpush1.msra.mxu0 0.0
    %172 = vmatprep.subr.mxu0 0.0
    %173 = vmatpush1.msra.mxu0 0.0
    %174 = vmatprep.subr.mxu0 0.0
    %175 = vmatpush1.msra.mxu0 0.0
    %176 = vmatprep.subr.mxu0 0.0
    %177 = vmatpush1.msra.mxu0 0.0
    %178 = vmatprep.subr.mxu0 0.0
    %179 = vmatpush1.msra.mxu0 0.0
    %180 = vmatprep.subr.mxu0 0.0
    %181 = vmatpush1.msra.mxu0 0.0
    %182 = vmatprep.subr.mxu0 0.0
    %183 = vmatpush1.msra.mxu0 0.0
    %184 = vmatprep.subr.mxu0 0.0
    %185 = vmatpush1.msra.mxu0 0.0
    %186 = vmatprep.mubr.f32.mxu0 0.0
    %187 = vmatmul.mubr.f32.gmra.mrb[0].mxu0 %v120
    %v188 = vpop.f32.mrb[0].mxu0
    %v189 = vadd.f32 %v117, %v188
    %v190 = vpop.f32.mrb[0].mxu0
    %191 = vdwg.mxu0
    %v192 = vld [vmem:[%s1] sm:$0xff]
    %v193 = vld [vmem:[#allocation2 + $0x78] sm:$0xff]
    %v194 = vld [vmem:[#allocation2 + $0x80] sm:$0xff]
    %v195 = vld [vmem:[#allocation2 + $0x88] sm:$0xff]
    %s196 = scalar_lea.vmem [#allocation2], 2
    %v197 = vld [vmem:[%s196] ss:$8 sm:$0x7]
    %v199 = vlaneseq
    %v200 = vshrl.u32 %v199, 7
    %v201 = vsub.s32 0, %v200
    %v202 = vrot.slane %v197, %v201
    %v203 = vlaneseq
    %v204 = vshrl.u32 %v203, 7
    %v205 = vsub.s32 1, %v204
    %v206 = vrot.slane %v197, %v205
    %v207 = vlaneseq
    %v208 = vshrl.u32 %v207, 7
    %v209 = vsub.s32 2, %v208
    %v210 = vrot.slane %v197, %v209
    %v215 = vsel %vm40, %v189, 0
    %217 = vmatprep.subr.mxu0 %v194
    %218 = vmatpush1.msra.mxu0 %v193
    %219 = vmatprep.subr.mxu0 0.0
    %220 = vmatpush1.msra.mxu0 0.0
    %221 = vmatprep.subr.mxu0 0.0
    %222 = vmatpush1.msra.mxu0 0.0
    %223 = vmatprep.subr.mxu0 0.0
    %224 = vmatpush1.msra.mxu0 0.0
    %225 = vmatprep.subr.mxu0 0.0
    %226 = vmatpush1.msra.mxu0 0.0
    %227 = vmatprep.subr.mxu0 0.0
    %228 = vmatpush1.msra.mxu0 0.0
    %229 = vmatprep.subr.mxu0 0.0
    %230 = vmatpush1.msra.mxu0 0.0
    %231 = vmatprep.subr.mxu0 0.0
    %232 = vmatpush1.msra.mxu0 0.0
    %233 = vmatprep.subr.mxu0 0.0
    %234 = vmatpush1.msra.mxu0 0.0
    %235 = vmatprep.subr.mxu0 0.0
    %236 = vmatpush1.msra.mxu0 0.0
    %237 = vmatprep.subr.mxu0 0.0
    %238 = vmatpush1.msra.mxu0 0.0
    %239 = vmatprep.subr.mxu0 0.0
    %240 = vmatpush1.msra.mxu0 0.0
    %241 = vmatprep.subr.mxu0 0.0
    %242 = vmatpush1.msra.mxu0 0.0
    %243 = vmatprep.subr.mxu0 0.0
    %244 = vmatpush1.msra.mxu0 0.0
    %245 = vmatprep.subr.mxu0 0.0
    %246 = vmatpush1.msra.mxu0 0.0
    %247 = vmatprep.subr.mxu0 0.0
    %248 = vmatpush1.msra.mxu0 0.0
    %249 = vmatprep.subr.mxu0 0.0
    %250 = vmatpush1.msra.mxu0 0.0
    %251 = vmatprep.subr.mxu0 0.0
    %252 = vmatpush1.msra.mxu0 0.0
    %253 = vmatprep.subr.mxu0 0.0
    %254 = vmatpush1.msra.mxu0 0.0
    %255 = vmatprep.subr.mxu0 0.0
    %256 = vmatpush1.msra.mxu0 0.0
    %257 = vmatprep.subr.mxu0 0.0
    %258 = vmatpush1.msra.mxu0 0.0
    %259 = vmatprep.subr.mxu0 0.0
    %260 = vmatpush1.msra.mxu0 0.0
    %261 = vmatprep.subr.mxu0 0.0
    %262 = vmatpush1.msra.mxu0 0.0
    %263 = vmatprep.subr.mxu0 0.0
    %264 = vmatpush1.msra.mxu0 0.0
    %265 = vmatprep.subr.mxu0 0.0
    %266 = vmatpush1.msra.mxu0 0.0
    %267 = vmatprep.subr.mxu0 0.0
    %268 = vmatpush1.msra.mxu0 0.0
    %269 = vmatprep.subr.mxu0 0.0
    %270 = vmatpush1.msra.mxu0 0.0
    %271 = vmatprep.subr.mxu0 0.0
    %272 = vmatpush1.msra.mxu0 0.0
    %273 = vmatprep.subr.mxu0 0.0
    %274 = vmatpush1.msra.mxu0 0.0
    %275 = vmatprep.subr.mxu0 0.0
    %276 = vmatpush1.msra.mxu0 0.0
    %277 = vmatprep.subr.mxu0 0.0
    %278 = vmatpush1.msra.mxu0 0.0
    %279 = vmatprep.subr.mxu0 0.0
    %280 = vmatpush1.msra.mxu0 0.0
    %281 = vmatprep.mubr.f32.mxu0 0.0
    %282 = vmatmul.mubr.f32.gmra.mrb[0].mxu0 %v215
    %v283 = vpop.f32.mrb[0].mxu0
    %v284 = vadd.f32 %v202, %v283
    %v285 = vpop.f32.mrb[0].mxu0
    %v286 = vadd.f32 %v206, %v285
    %287 = vdwg.mxu0
    %288 = vmatprep.subr.mxu0 0.0
    %289 = vmatpush1.msra.mxu0 %v195
    %290 = vmatprep.subr.mxu0 0.0
    %291 = vmatpush1.msra.mxu0 0.0
    %292 = vmatprep.subr.mxu0 0.0
    %293 = vmatpush1.msra.mxu0 0.0
    %294 = vmatprep.subr.mxu0 0.0
    %295 = vmatpush1.msra.mxu0 0.0
    %296 = vmatprep.subr.mxu0 0.0
    %297 = vmatpush1.msra.mxu0 0.0
    %298 = vmatprep.subr.mxu0 0.0
    %299 = vmatpush1.msra.mxu0 0.0
    %300 = vmatprep.subr.mxu0 0.0
    %301 = vmatpush1.msra.mxu0 0.0
    %302 = vmatprep.subr.mxu0 0.0
    %303 = vmatpush1.msra.mxu0 0.0
    %304 = vmatprep.subr.mxu0 0.0
    %305 = vmatpush1.msra.mxu0 0.0
    %306 = vmatprep.subr.mxu0 0.0
    %307 = vmatpush1.msra.mxu0 0.0
    %308 = vmatprep.subr.mxu0 0.0
    %309 = vmatpush1.msra.mxu0 0.0
    %310 = vmatprep.subr.mxu0 0.0
    %311 = vmatpush1.msra.mxu0 0.0
    %312 = vmatprep.subr.mxu0 0.0
    %313 = vmatpush1.msra.mxu0 0.0
    %314 = vmatprep.subr.mxu0 0.0
    %315 = vmatpush1.msra.mxu0 0.0
    %316 = vmatprep.subr.mxu0 0.0
    %317 = vmatpush1.msra.mxu0 0.0
    %318 = vmatprep.subr.mxu0 0.0
    %319 = vmatpush1.msra.mxu0 0.0
    %320 = vmatprep.subr.mxu0 0.0
    %321 = vmatpush1.msra.mxu0 0.0
    %322 = vmatprep.subr.mxu0 0.0
    %323 = vmatpush1.msra.mxu0 0.0
    %324 = vmatprep.subr.mxu0 0.0
    %325 = vmatpush1.msra.mxu0 0.0
    %326 = vmatprep.subr.mxu0 0.0
    %327 = vmatpush1.msra.mxu0 0.0
    %328 = vmatprep.subr.mxu0 0.0
    %329 = vmatpush1.msra.mxu0 0.0
    %330 = vmatprep.subr.mxu0 0.0
    %331 = vmatpush1.msra.mxu0 0.0
    %332 = vmatprep.subr.mxu0 0.0
    %333 = vmatpush1.msra.mxu0 0.0
    %334 = vmatprep.subr.mxu0 0.0
    %335 = vmatpush1.msra.mxu0 0.0
    %336 = vmatprep.subr.mxu0 0.0
    %337 = vmatpush1.msra.mxu0 0.0
    %338 = vmatprep.subr.mxu0 0.0
    %339 = vmatpush1.msra.mxu0 0.0
    %340 = vmatprep.subr.mxu0 0.0
    %341 = vmatpush1.msra.mxu0 0.0
    %342 = vmatprep.subr.mxu0 0.0
    %343 = vmatpush1.msra.mxu0 0.0
    %344 = vmatprep.subr.mxu0 0.0
    %345 = vmatpush1.msra.mxu0 0.0
    %346 = vmatprep.subr.mxu0 0.0
    %347 = vmatpush1.msra.mxu0 0.0
    %348 = vmatprep.subr.mxu0 0.0
    %349 = vmatpush1.msra.mxu0 0.0
    %350 = vmatprep.subr.mxu0 0.0
    %351 = vmatpush1.msra.mxu0 0.0
    %352 = vmatprep.mubr.f32.mxu0 0.0
    %353 = vmatmul.mubr.f32.gmra.mrb[0].mxu0 %v215
    %v354 = vpop.f32.mrb[0].mxu0
    %v355 = vadd.f32 %v210, %v354
    %v356 = vpop.f32.mrb[0].mxu0
    %357 = vdwg.mxu0
    %v358 = vld [vmem:[#allocation2 + $0x90] sm:$0xff]
    %v359 = vld [vmem:[#allocation2 + $0x98] sm:$0xff]
    %v360 = vld [vmem:[#allocation2 + $0xa0] sm:$0xff]
    %v361 = vld [vmem:[#allocation2 + $0xa8] sm:$0xff]
    %v362 = vld [vmem:[#allocation2 + $0xb0] sm:$0xff]
    %v363 = vld [vmem:[#allocation2 + $0xb8] sm:$0xff]
    %s364 = scalar_lea.vmem [#allocation2], 3
    %v365 = vld [vmem:[%s364] ss:$8 sm:$0x7]
    %v367 = vlaneseq
    %v368 = vshrl.u32 %v367, 7
    %v369 = vsub.s32 0, %v368
    %v370 = vrot.slane %v365, %v369
    %v371 = vlaneseq
    %v372 = vshrl.u32 %v371, 7
    %v373 = vsub.s32 1, %v372
    %v374 = vrot.slane %v365, %v373
    %v375 = vlaneseq
    %v376 = vshrl.u32 %v375, 7
    %v377 = vsub.s32 2, %v376
    %v378 = vrot.slane %v365, %v377
    %v383 = vsel %vm118, %v192, 0
    %385 = vmatprep.subr.mxu0 %v359
    %386 = vmatpush1.msra.mxu0 %v358
    %387 = vmatprep.subr.mxu0 %v362
    %388 = vmatpush1.msra.mxu0 %v361
    %389 = vmatprep.subr.mxu0 0.0
    %390 = vmatpush1.msra.mxu0 0.0
    %391 = vmatprep.subr.mxu0 0.0
    %392 = vmatpush1.msra.mxu0 0.0
    %393 = vmatprep.subr.mxu0 0.0
    %394 = vmatpush1.msra.mxu0 0.0
    %395 = vmatprep.subr.mxu0 0.0
    %396 = vmatpush1.msra.mxu0 0.0
    %397 = vmatprep.subr.mxu0 0.0
    %398 = vmatpush1.msra.mxu0 0.0
    %399 = vmatprep.subr.mxu0 0.0
    %400 = vmatpush1.msra.mxu0 0.0
    %401 = vmatprep.subr.mxu0 0.0
    %402 = vmatpush1.msra.mxu0 0.0
    %403 = vmatprep.subr.mxu0 0.0
    %404 = vmatpush1.msra.mxu0 0.0
    %405 = vmatprep.subr.mxu0 0.0
    %406 = vmatpush1.msra.mxu0 0.0
    %407 = vmatprep.subr.mxu0 0.0
    %408 = vmatpush1.msra.mxu0 0.0
    %409 = vmatprep.subr.mxu0 0.0
    %410 = vmatpush1.msra.mxu0 0.0
    %411 = vmatprep.subr.mxu0 0.0
    %412 = vmatpush1.msra.mxu0 0.0
    %413 = vmatprep.subr.mxu0 0.0
    %414 = vmatpush1.msra.mxu0 0.0
    %415 = vmatprep.subr.mxu0 0.0
    %416 = vmatpush1.msra.mxu0 0.0
    %417 = vmatprep.subr.mxu0 0.0
    %418 = vmatpush1.msra.mxu0 0.0
    %419 = vmatprep.subr.mxu0 0.0
    %420 = vmatpush1.msra.mxu0 0.0
    %421 = vmatprep.subr.mxu0 0.0
    %422 = vmatpush1.msra.mxu0 0.0
    %423 = vmatprep.subr.mxu0 0.0
    %424 = vmatpush1.msra.mxu0 0.0
    %425 = vmatprep.subr.mxu0 0.0
    %426 = vmatpush1.msra.mxu0 0.0
    %427 = vmatprep.subr.mxu0 0.0
    %428 = vmatpush1.msra.mxu0 0.0
    %429 = vmatprep.subr.mxu0 0.0
    %430 = vmatpush1.msra.mxu0 0.0
    %431 = vmatprep.subr.mxu0 0.0
    %432 = vmatpush1.msra.mxu0 0.0
    %433 = vmatprep.subr.mxu0 0.0
    %434 = vmatpush1.msra.mxu0 0.0
    %435 = vmatprep.subr.mxu0 0.0
    %436 = vmatpush1.msra.mxu0 0.0
    %437 = vmatprep.subr.mxu0 0.0
    %438 = vmatpush1.msra.mxu0 0.0
    %439 = vmatprep.subr.mxu0 0.0
    %440 = vmatpush1.msra.mxu0 0.0
    %441 = vmatprep.subr.mxu0 0.0
    %442 = vmatpush1.msra.mxu0 0.0
    %443 = vmatprep.subr.mxu0 0.0
    %444 = vmatpush1.msra.mxu0 0.0
    %445 = vmatprep.subr.mxu0 0.0
    %446 = vmatpush1.msra.mxu0 0.0
    %447 = vmatprep.subr.mxu0 0.0
    %448 = vmatpush1.msra.mxu0 0.0
    %449 = vmatprep.mubr.f32.mxu0 0.0
    %450 = vmatmul.mubr.f32.gmra.mrb[0].mxu0 %v383
    %v451 = vpop.f32.mrb[0].mxu0
    %v452 = vadd.f32 %v370, %v451
    %v453 = vpop.f32.mrb[0].mxu0
    %v454 = vadd.f32 %v374, %v453
    %455 = vdwg.mxu0
    %456 = vmatprep.subr.mxu0 0.0
    %457 = vmatpush1.msra.mxu0 %v360
    %458 = vmatprep.subr.mxu0 0.0
    %459 = vmatpush1.msra.mxu0 %v363
    %460 = vmatprep.subr.mxu0 0.0
    %461 = vmatpush1.msra.mxu0 0.0
    %462 = vmatprep.subr.mxu0 0.0
    %463 = vmatpush1.msra.mxu0 0.0
    %464 = vmatprep.subr.mxu0 0.0
    %465 = vmatpush1.msra.mxu0 0.0
    %466 = vmatprep.subr.mxu0 0.0
    %467 = vmatpush1.msra.mxu0 0.0
    %468 = vmatprep.subr.mxu0 0.0
    %469 = vmatpush1.msra.mxu0 0.0
    %470 = vmatprep.subr.mxu0 0.0
    %471 = vmatpush1.msra.mxu0 0.0
    %472 = vmatprep.subr.mxu0 0.0
    %473 = vmatpush1.msra.mxu0 0.0
    %474 = vmatprep.subr.mxu0 0.0
    %475 = vmatpush1.msra.mxu0 0.0
    %476 = vmatprep.subr.mxu0 0.0
    %477 = vmatpush1.msra.mxu0 0.0
    %478 = vmatprep.subr.mxu0 0.0
    %479 = vmatpush1.msra.mxu0 0.0
    %480 = vmatprep.subr.mxu0 0.0
    %481 = vmatpush1.msra.mxu0 0.0
    %482 = vmatprep.subr.mxu0 0.0
    %483 = vmatpush1.msra.mxu0 0.0
    %484 = vmatprep.subr.mxu0 0.0
    %485 = vmatpush1.msra.mxu0 0.0
    %486 = vmatprep.subr.mxu0 0.0
    %487 = vmatpush1.msra.mxu0 0.0
    %488 = vmatprep.subr.mxu0 0.0
    %489 = vmatpush1.msra.mxu0 0.0
    %490 = vmatprep.subr.mxu0 0.0
    %491 = vmatpush1.msra.mxu0 0.0
    %492 = vmatprep.subr.mxu0 0.0
    %493 = vmatpush1.msra.mxu0 0.0
    %494 = vmatprep.subr.mxu0 0.0
    %495 = vmatpush1.msra.mxu0 0.0
    %496 = vmatprep.subr.mxu0 0.0
    %497 = vmatpush1.msra.mxu0 0.0
    %498 = vmatprep.subr.mxu0 0.0
    %499 = vmatpush1.msra.mxu0 0.0
    %500 = vmatprep.subr.mxu0 0.0
    %501 = vmatpush1.msra.mxu0 0.0
    %502 = vmatprep.subr.mxu0 0.0
    %503 = vmatpush1.msra.mxu0 0.0
    %504 = vmatprep.subr.mxu0 0.0
    %505 = vmatpush1.msra.mxu0 0.0
    %506 = vmatprep.subr.mxu0 0.0
    %507 = vmatpush1.msra.mxu0 0.0
    %508 = vmatprep.subr.mxu0 0.0
    %509 = vmatpush1.msra.mxu0 0.0
    %510 = vmatprep.subr.mxu0 0.0
    %511 = vmatpush1.msra.mxu0 0.0
    %512 = vmatprep.subr.mxu0 0.0
    %513 = vmatpush1.msra.mxu0 0.0
    %514 = vmatprep.subr.mxu0 0.0
    %515 = vmatpush1.msra.mxu0 0.0
    %516 = vmatprep.subr.mxu0 0.0
    %517 = vmatpush1.msra.mxu0 0.0
    %518 = vmatprep.subr.mxu0 0.0
    %519 = vmatpush1.msra.mxu0 0.0
    %520 = vmatprep.mubr.f32.mxu0 0.0
    %521 = vmatmul.mubr.f32.gmra.mrb[0].mxu0 %v383
    %v522 = vpop.f32.mrb[0].mxu0
    %v523 = vadd.f32 %v378, %v522
    %v524 = vpop.f32.mrb[0].mxu0
    %525 = vdwg.mxu0
    %v526 = vadd.f32 %v284, %v452
    %v527 = vxor.u32 %v526, 2147483648
    %v528 = vmul.f32 %v527, 1.442695
    %v529 = vpow.pop %v528
    %v530 = vadd.f32 %v529, 1.0
    %v531 = vrcp.pop %v530
    %v532 = vmul.f32 1.0, %v531
    %v533 = vadd.f32 %v286, %v454
    %v534 = vxor.u32 %v533, 2147483648
    %v535 = vmul.f32 %v534, 1.442695
    %v536 = vpow.pop %v535
    %v537 = vadd.f32 %v536, 1.0
    %v538 = vrcp.pop %v537
    %v539 = vmul.f32 1.0, %v538
    %v540 = vmul.f32 %v532, %v523
    %v541 = vadd.f32 %v355, %v540
    %v542 = vtanh.pop %v541
    %v543 = vsub.f32 1.0, %v539
    %v544 = vmul.f32 %v543, %v542
    %v545 = vmul.f32 %v539, %v192
    %v546 = vadd.f32 %v544, %v545
    %547 = vst [vmem:[%s6] sm:$0xff] %v546
    %v548 = vmax.f32 %v546, 0.0
    %v549 = vld [vmem:[#allocation2 + $0xc0] sm:$0xff]
    %v550 = vld [vmem:[#allocation2 + $0xd8] sm:$0xff]
    %v551 = vld [vmem:[#allocation2 + $0x4] ss:$0 sm:$0xff]
    %v553 = vsel %vm118, %v548, 0
    %555 = vmatprep.subr.mxu0 0.0
    %556 = vmatpush1.msra.mxu0 %v549
    %557 = vmatprep.subr.mxu0 0.0
    %558 = vmatpush1.msra.mxu0 %v550
    %559 = vmatprep.subr.mxu0 0.0
    %560 = vmatpush1.msra.mxu0 0.0
    %561 = vmatprep.subr.mxu0 0.0
    %562 = vmatpush1.msra.mxu0 0.0
    %563 = vmatprep.subr.mxu0 0.0
    %564 = vmatpush1.msra.mxu0 0.0
    %565 = vmatprep.subr.mxu0 0.0
    %566 = vmatpush1.msra.mxu0 0.0
    %567 = vmatprep.subr.mxu0 0.0
    %568 = vmatpush1.msra.mxu0 0.0
    %569 = vmatprep.subr.mxu0 0.0
    %570 = vmatpush1.msra.mxu0 0.0
    %571 = vmatprep.subr.mxu0 0.0
    %572 = vmatpush1.msra.mxu0 0.0
    %573 = vmatprep.subr.mxu0 0.0
    %574 = vmatpush1.msra.mxu0 0.0
    %575 = vmatprep.subr.mxu0 0.0
    %576 = vmatpush1.msra.mxu0 0.0
    %577 = vmatprep.subr.mxu0 0.0
    %578 = vmatpush1.msra.mxu0 0.0
    %579 = vmatprep.subr.mxu0 0.0
    %580 = vmatpush1.msra.mxu0 0.0
    %581 = vmatprep.subr.mxu0 0.0
    %582 = vmatpush1.msra.mxu0 0.0
    %583 = vmatprep.subr.mxu0 0.0
    %584 = vmatpush1.msra.mxu0 0.0
    %585 = vmatprep.subr.mxu0 0.0
    %586 = vmatpush1.msra.mxu0 0.0
    %587 = vmatprep.subr.mxu0 0.0
    %588 = vmatpush1.msra.mxu0 0.0
    %589 = vmatprep.subr.mxu0 0.0
    %590 = vmatpush1.msra.mxu0 0.0
    %591 = vmatprep.subr.mxu0 0.0
    %592 = vmatpush1.msra.mxu0 0.0
    %593 = vmatprep.subr.mxu0 0.0
    %594 = vmatpush1.msra.mxu0 0.0
    %595 = vmatprep.subr.mxu0 0.0
    %596 = vmatpush1.msra.mxu0 0.0
    %597 = vmatprep.subr.mxu0 0.0
    %598 = vmatpush1.msra.mxu0 0.0
    %599 = vmatprep.subr.mxu0 0.0
    %600 = vmatpush1.msra.mxu0 0.0
    %601 = vmatprep.subr.mxu0 0.0
    %602 = vmatpush1.msra.mxu0 0.0
    %603 = vmatprep.subr.mxu0 0.0
    %604 = vmatpush1.msra.mxu0 0.0
    %605 = vmatprep.subr.mxu0 0.0
    %606 = vmatpush1.msra.mxu0 0.0
    %607 = vmatprep.subr.mxu0 0.0
    %608 = vmatpush1.msra.mxu0 0.0
    %609 = vmatprep.subr.mxu0 0.0
    %610 = vmatpush1.msra.mxu0 0.0
    %611 = vmatprep.subr.mxu0 0.0
    %612 = vmatpush1.msra.mxu0 0.0
    %613 = vmatprep.subr.mxu0 0.0
    %614 = vmatpush1.msra.mxu0 0.0
    %615 = vmatprep.subr.mxu0 0.0
    %616 = vmatpush1.msra.mxu0 0.0
    %617 = vmatprep.subr.mxu0 0.0
    %618 = vmatpush1.msra.mxu0 0.0
    %619 = vmatprep.mubr.f32.mxu0 0.0
    %620 = vmatmul.mubr.f32.gmra.mrb[0].mxu0 %v553
    %v621 = vpop.f32.mrb[0].mxu0
    %v622 = vadd.f32 %v551, %v621
    %v623 = vpop.f32.mrb[0].mxu0
    %624 = vdwg.mxu0
    %v625 = vld [vmem:[#allocation2 + $0xf0] sm:$0xff]
    %v626 = vld [vmem:[#allocation2 + $0xf8] sm:$0xff]
    %v628 = vsel %vm40, %v622, 0
    %630 = vmatprep.subr.mxu0 %v626
    %631 = vmatpush1.msra.mxu0 %v625
    %632 = vmatprep.subr.mxu0 0.0
    %633 = vmatpush1.msra.mxu0 0.0
    %634 = vmatprep.subr.mxu0 0.0
    %635 = vmatpush1.msra.mxu0 0.0
    %636 = vmatprep.subr.mxu0 0.0
    %637 = vmatpush1.msra.mxu0 0.0
    %638 = vmatprep.subr.mxu0 0.0
    %639 = vmatpush1.msra.mxu0 0.0
    %640 = vmatprep.subr.mxu0 0.0
    %641 = vmatpush1.msra.mxu0 0.0
    %642 = vmatprep.subr.mxu0 0.0
    %643 = vmatpush1.msra.mxu0 0.0
    %644 = vmatprep.subr.mxu0 0.0
    %645 = vmatpush1.msra.mxu0 0.0
    %646 = vmatprep.subr.mxu0 0.0
    %647 = vmatpush1.msra.mxu0 0.0
    %648 = vmatprep.subr.mxu0 0.0
    %649 = vmatpush1.msra.mxu0 0.0
    %650 = vmatprep.subr.mxu0 0.0
    %651 = vmatpush1.msra.mxu0 0.0
    %652 = vmatprep.subr.mxu0 0.0
    %653 = vmatpush1.msra.mxu0 0.0
    %654 = vmatprep.subr.mxu0 0.0
    %655 = vmatpush1.msra.mxu0 0.0
    %656 = vmatprep.subr.mxu0 0.0
    %657 = vmatpush1.msra.mxu0 0.0
    %658 = vmatprep.subr.mxu0 0.0
    %659 = vmatpush1.msra.mxu0 0.0
    %660 = vmatprep.subr.mxu0 0.0
    %661 = vmatpush1.msra.mxu0 0.0
    %662 = vmatprep.subr.mxu0 0.0
    %663 = vmatpush1.msra.mxu0 0.0
    %664 = vmatprep.subr.mxu0 0.0
    %665 = vmatpush1.msra.mxu0 0.0
    %666 = vmatprep.subr.mxu0 0.0
    %667 = vmatpush1.msra.mxu0 0.0
    %668 = vmatprep.subr.mxu0 0.0
    %669 = vmatpush1.msra.mxu0 0.0
    %670 = vmatprep.subr.mxu0 0.0
    %671 = vmatpush1.msra.mxu0 0.0
    %672 = vmatprep.subr.mxu0 0.0
    %673 = vmatpush1.msra.mxu0 0.0
    %674 = vmatprep.subr.mxu0 0.0
    %675 = vmatpush1.msra.mxu0 0.0
    %676 = vmatprep.subr.mxu0 0.0
    %677 = vmatpush1.msra.mxu0 0.0
    %678 = vmatprep.subr.mxu0 0.0
    %679 = vmatpush1.msra.mxu0 0.0
    %680 = vmatprep.subr.mxu0 0.0
    %681 = vmatpush1.msra.mxu0 0.0
    %682 = vmatprep.subr.mxu0 0.0
    %683 = vmatpush1.msra.mxu0 0.0
    %684 = vmatprep.subr.mxu0 0.0
    %685 = vmatpush1.msra.mxu0 0.0
    %686 = vmatprep.subr.mxu0 0.0
    %687 = vmatpush1.msra.mxu0 0.0
    %688 = vmatprep.subr.mxu0 0.0
    %689 = vmatpush1.msra.mxu0 0.0
    %690 = vmatprep.subr.mxu0 0.0
    %691 = vmatpush1.msra.mxu0 0.0
    %692 = vmatprep.subr.mxu0 0.0
    %693 = vmatpush1.msra.mxu0 0.0
    %694 = vmatprep.mubr.f32.mxu0 0.0
    %695 = vmatmul.mubr.f32.gmra.mrb[0].mxu0 %v628
    %v696 = vpop.f32.mrb[0].mxu0
    %v697 = vadd.f32 0.0, %v696
    %v698 = vpop.f32.mrb[0].mxu0
    %v699 = vadd.f32 0.0, %v698
    %700 = vdwg.mxu0
    %v701 = vlaneseq
    %v702 = vand.u32 %v701, 127
    %v703 = vld [vmem:[%s3] sm:$0xff]
    %v704 = vld [vmem:[%s3 + $0x8] sm:$0xf]
    %705 = vset.pattern.permute.xlu0 0
    %706 = vperm.xlu0 %705, %v703
    %v707 = vpop.permute.xlu0 %706
    %708 = vset.pattern.permute.xlu0 0
    %709 = vperm.xlu0 %708, %v704
    %v710 = vpop.permute.xlu0 %709
    %vm711 = vcmp.eq.s32.totalorder %v702, %v707
    %vm712 = vcmp.eq.s32.totalorder %v702, %v710
    %v713 = vsel %vm711, 1, 0
    %v714 = vsel %vm712, 1, 0
    %v715 = vcvt.s32.f32 %v713
    %v716 = vcvt.s32.f32 %v714
    %717 = vset.pattern.permute.xlu0 1
    %718 = vperm.xlu0 %717, %v703
    %v719 = vpop.permute.xlu0 %718
    %720 = vset.pattern.permute.xlu0 1
    %721 = vperm.xlu0 %720, %v704
    %v722 = vpop.permute.xlu0 %721
    %vm723 = vcmp.eq.s32.totalorder %v702, %v719
    %vm724 = vcmp.eq.s32.totalorder %v702, %v722
    %v725 = vsel %vm723, 1, 0
    %v726 = vsel %vm724, 1, 0
    %v727 = vcvt.s32.f32 %v725
    %v728 = vcvt.s32.f32 %v726
    %v730 = vsel %vm40, %v727, 0
    %v733 = vsel %vm40, %v728, 0
    %735 = vmatprep.subr.mxu0 0.0
    %736 = vmatpush1.msra.mxu0 %v699
    %737 = vmatprep.subr.mxu0 0.0
    %738 = vmatpush1.msra.mxu0 0.0
    %739 = vmatprep.subr.mxu0 0.0
    %740 = vmatpush1.msra.mxu0 0.0
    %741 = vmatprep.subr.mxu0 0.0
    %742 = vmatpush1.msra.mxu0 0.0
    %743 = vmatprep.subr.mxu0 0.0
    %744 = vmatpush1.msra.mxu0 0.0
    %745 = vmatprep.subr.mxu0 0.0
    %746 = vmatpush1.msra.mxu0 0.0
    %747 = vmatprep.subr.mxu0 0.0
    %748 = vmatpush1.msra.mxu0 0.0
    %749 = vmatprep.subr.mxu0 0.0
    %750 = vmatpush1.msra.mxu0 0.0
    %751 = vmatprep.subr.mxu0 0.0
    %752 = vmatpush1.msra.mxu0 0.0
    %753 = vmatprep.subr.mxu0 0.0
    %754 = vmatpush1.msra.mxu0 0.0
    %755 = vmatprep.subr.mxu0 0.0
    %756 = vmatpush1.msra.mxu0 0.0
    %757 = vmatprep.subr.mxu0 0.0
    %758 = vmatpush1.msra.mxu0 0.0
    %759 = vmatprep.subr.mxu0 0.0
    %760 = vmatpush1.msra.mxu0 0.0
    %761 = vmatprep.subr.mxu0 0.0
    %762 = vmatpush1.msra.mxu0 0.0
    %763 = vmatprep.subr.mxu0 0.0
    %764 = vmatpush1.msra.mxu0 0.0
    %765 = vmatprep.subr.mxu0 0.0
    %766 = vmatpush1.msra.mxu0 0.0
    %767 = vmatprep.subr.mxu0 0.0
    %768 = vmatpush1.msra.mxu0 0.0
    %769 = vmatprep.subr.mxu0 0.0
    %770 = vmatpush1.msra.mxu0 0.0
    %771 = vmatprep.subr.mxu0 0.0
    %772 = vmatpush1.msra.mxu0 0.0
    %773 = vmatprep.subr.mxu0 0.0
    %774 = vmatpush1.msra.mxu0 0.0
    %775 = vmatprep.subr.mxu0 0.0
    %776 = vmatpush1.msra.mxu0 0.0
    %777 = vmatprep.subr.mxu0 0.0
    %778 = vmatpush1.msra.mxu0 0.0
    %779 = vmatprep.subr.mxu0 0.0
    %780 = vmatpush1.msra.mxu0 0.0
    %781 = vmatprep.subr.mxu0 0.0
    %782 = vmatpush1.msra.mxu0 0.0
    %783 = vmatprep.subr.mxu0 0.0
    %784 = vmatpush1.msra.mxu0 0.0
    %785 = vmatprep.subr.mxu0 0.0
    %786 = vmatpush1.msra.mxu0 0.0
    %787 = vmatprep.subr.mxu0 0.0
    %788 = vmatpush1.msra.mxu0 0.0
    %789 = vmatprep.subr.mxu0 0.0
    %790 = vmatpush1.msra.mxu0 0.0
    %791 = vmatprep.subr.mxu0 0.0
    %792 = vmatpush1.msra.mxu0 0.0
    %793 = vmatprep.subr.mxu0 0.0
    %794 = vmatpush1.msra.mxu0 0.0
    %795 = vmatprep.subr.mxu0 0.0
    %796 = vmatpush1.msra.mxu0 0.0
    %797 = vmatprep.subr.mxu0 0.0
    %798 = vmatpush1.msra.mxu0 0.0
    %799 = vmatprep.mubr.f32.mxu0 0.0
    %800 = vmatmul.mubr.f32.gmra.mrb[0].mxu0 %v730
    %v801 = vpop.f32.mrb[0].mxu0
    %v802 = vadd.f32 0.0, %v801
    %v803 = vpop.f32.mrb[0].mxu0
    %804 = vmatprep.mubr.f32.mxu0 0.0
    %805 = vmatmul.mubr.f32.gmra.mrb[0].mxu0 %v733
    %v806 = vpop.f32.mrb[0].mxu0
    %v807 = vadd.f32 0.0, %v806
    %v808 = vpop.f32.mrb[0].mxu0
    %809 = vdwg.mxu0
    %v811 = vsel %vm40, %v715, 0
    %v814 = vsel %vm40, %v716, 0
    %816 = vmatprep.subr.mxu0 0.0
    %817 = vmatpush1.msra.mxu0 %v697
    %818 = vmatprep.subr.mxu0 0.0
    %819 = vmatpush1.msra.mxu0 0.0
    %820 = vmatprep.subr.mxu0 0.0
    %821 = vmatpush1.msra.mxu0 0.0
    %822 = vmatprep.subr.mxu0 0.0
    %823 = vmatpush1.msra.mxu0 0.0
    %824 = vmatprep.subr.mxu0 0.0
    %825 = vmatpush1.msra.mxu0 0.0
    %826 = vmatprep.subr.mxu0 0.0
    %827 = vmatpush1.msra.mxu0 0.0
    %828 = vmatprep.subr.mxu0 0.0
    %829 = vmatpush1.msra.mxu0 0.0
    %830 = vmatprep.subr.mxu0 0.0
    %831 = vmatpush1.msra.mxu0 0.0
    %832 = vmatprep.subr.mxu0 0.0
    %833 = vmatpush1.msra.mxu0 0.0
    %834 = vmatprep.subr.mxu0 0.0
    %835 = vmatpush1.msra.mxu0 0.0
    %836 = vmatprep.subr.mxu0 0.0
    %837 = vmatpush1.msra.mxu0 0.0
    %838 = vmatprep.subr.mxu0 0.0
    %839 = vmatpush1.msra.mxu0 0.0
    %840 = vmatprep.subr.mxu0 0.0
    %841 = vmatpush1.msra.mxu0 0.0
    %842 = vmatprep.subr.mxu0 0.0
    %843 = vmatpush1.msra.mxu0 0.0
    %844 = vmatprep.subr.mxu0 0.0
    %845 = vmatpush1.msra.mxu0 0.0
    %846 = vmatprep.subr.mxu0 0.0
    %847 = vmatpush1.msra.mxu0 0.0
    %848 = vmatprep.subr.mxu0 0.0
    %849 = vmatpush1.msra.mxu0 0.0
    %850 = vmatprep.subr.mxu0 0.0
    %851 = vmatpush1.msra.mxu0 0.0
    %852 = vmatprep.subr.mxu0 0.0
    %853 = vmatpush1.msra.mxu0 0.0
    %854 = vmatprep.subr.mxu0 0.0
    %855 = vmatpush1.msra.mxu0 0.0
    %856 = vmatprep.subr.mxu0 0.0
    %857 = vmatpush1.msra.mxu0 0.0
    %858 = vmatprep.subr.mxu0 0.0
    %859 = vmatpush1.msra.mxu0 0.0
    %860 = vmatprep.subr.mxu0 0.0
    %861 = vmatpush1.msra.mxu0 0.0
    %862 = vmatprep.subr.mxu0 0.0
    %863 = vmatpush1.msra.mxu0 0.0
    %864 = vmatprep.subr.mxu0 0.0
    %865 = vmatpush1.msra.mxu0 0.0
    %866 = vmatprep.subr.mxu0 0.0
    %867 = vmatpush1.msra.mxu0 0.0
    %868 = vmatprep.subr.mxu0 0.0
    %869 = vmatpush1.msra.mxu0 0.0
    %870 = vmatprep.subr.mxu0 0.0
    %871 = vmatpush1.msra.mxu0 0.0
    %872 = vmatprep.subr.mxu0 0.0
    %873 = vmatpush1.msra.mxu0 0.0
    %874 = vmatprep.subr.mxu0 0.0
    %875 = vmatpush1.msra.mxu0 0.0
    %876 = vmatprep.subr.mxu0 0.0
    %877 = vmatpush1.msra.mxu0 0.0
    %878 = vmatprep.subr.mxu0 0.0
    %879 = vmatpush1.msra.mxu0 0.0
    %880 = vmatprep.mubr.f32.mxu0 0.0
    %881 = vmatmul.mubr.f32.gmra.mrb[0].mxu0 %v811
    %v882 = vpop.f32.mrb[0].mxu0
    %v883 = vadd.f32 %v802, %v882
    %v884 = vpop.f32.mrb[0].mxu0
    %885 = vmatprep.mubr.f32.mxu0 0.0
    %886 = vmatmul.mubr.f32.gmra.mrb[0].mxu0 %v814
    %v887 = vpop.f32.mrb[0].mxu0
    %v888 = vadd.f32 %v807, %v887
    %v889 = vpop.f32.mrb[0].mxu0
    %890 = vdwg.mxu0
    %v891 = vld [vmem:[#allocation2 + $0x5] ss:$0 sm:$0xff]
    %v892 = vadd.f32 %v883, %v891
    %v893 = vadd.f32 %v888, %v891
    %v894 = vmax.f32 %v892, 0.0
    %v895 = vmax.f32 %v893, 0.0
    %v896 = vld [vmem:[#allocation2 + $0x108] sm:$0xff]
    %v897 = vld [vmem:[#allocation2 + $0x120] sm:$0xff]
    %v898 = vld [vmem:[#allocation2 + $0x6] ss:$0 sm:$0xff]
    %v900 = vsel %vm118, %v894, 0
    %v903 = vsel %vm118, %v895, 0
    %905 = vmatprep.subr.mxu0 0.0
    %906 = vmatpush1.msra.mxu0 %v896
    %907 = vmatprep.subr.mxu0 0.0
    %908 = vmatpush1.msra.mxu0 %v897
    %909 = vmatprep.subr.mxu0 0.0
    %910 = vmatpush1.msra.mxu0 0.0
    %911 = vmatprep.subr.mxu0 0.0
    %912 = vmatpush1.msra.mxu0 0.0
    %913 = vmatprep.subr.mxu0 0.0
    %914 = vmatpush1.msra.mxu0 0.0
    %915 = vmatprep.subr.mxu0 0.0
    %916 = vmatpush1.msra.mxu0 0.0
    %917 = vmatprep.subr.mxu0 0.0
    %918 = vmatpush1.msra.mxu0 0.0
    %919 = vmatprep.subr.mxu0 0.0
    %920 = vmatpush1.msra.mxu0 0.0
    %921 = vmatprep.subr.mxu0 0.0
    %922 = vmatpush1.msra.mxu0 0.0
    %923 = vmatprep.subr.mxu0 0.0
    %924 = vmatpush1.msra.mxu0 0.0
    %925 = vmatprep.subr.mxu0 0.0
    %926 = vmatpush1.msra.mxu0 0.0
    %927 = vmatprep.subr.mxu0 0.0
    %928 = vmatpush1.msra.mxu0 0.0
    %929 = vmatprep.subr.mxu0 0.0
    %930 = vmatpush1.msra.mxu0 0.0
    %931 = vmatprep.subr.mxu0 0.0
    %932 = vmatpush1.msra.mxu0 0.0
    %933 = vmatprep.subr.mxu0 0.0
    %934 = vmatpush1.msra.mxu0 0.0
    %935 = vmatprep.subr.mxu0 0.0
    %936 = vmatpush1.msra.mxu0 0.0
    %937 = vmatprep.subr.mxu0 0.0
    %938 = vmatpush1.msra.mxu0 0.0
    %939 = vmatprep.subr.mxu0 0.0
    %940 = vmatpush1.msra.mxu0 0.0
    %941 = vmatprep.subr.mxu0 0.0
    %942 = vmatpush1.msra.mxu0 0.0
    %943 = vmatprep.subr.mxu0 0.0
    %944 = vmatpush1.msra.mxu0 0.0
    %945 = vmatprep.subr.mxu0 0.0
    %946 = vmatpush1.msra.mxu0 0.0
    %947 = vmatprep.subr.mxu0 0.0
    %948 = vmatpush1.msra.mxu0 0.0
    %949 = vmatprep.subr.mxu0 0.0
    %950 = vmatpush1.msra.mxu0 0.0
    %951 = vmatprep.subr.mxu0 0.0
    %952 = vmatpush1.msra.mxu0 0.0
    %953 = vmatprep.subr.mxu0 0.0
    %954 = vmatpush1.msra.mxu0 0.0
    %955 = vmatprep.subr.mxu0 0.0
    %956 = vmatpush1.msra.mxu0 0.0
    %957 = vmatprep.subr.mxu0 0.0
    %958 = vmatpush1.msra.mxu0 0.0
    %959 = vmatprep.subr.mxu0 0.0
    %960 = vmatpush1.msra.mxu0 0.0
    %961 = vmatprep.subr.mxu0 0.0
    %962 = vmatpush1.msra.mxu0 0.0
    %963 = vmatprep.subr.mxu0 0.0
    %964 = vmatpush1.msra.mxu0 0.0
    %965 = vmatprep.subr.mxu0 0.0
    %966 = vmatpush1.msra.mxu0 0.0
    %967 = vmatprep.subr.mxu0 0.0
    %968 = vmatpush1.msra.mxu0 0.0
    %969 = vmatprep.mubr.f32.mxu0 0.0
    %970 = vmatmul.mubr.f32.gmra.mrb[0].mxu0 %v900
    %v971 = vpop.f32.mrb[0].mxu0
    %v972 = vadd.f32 %v898, %v971
    %v973 = vpop.f32.mrb[0].mxu0
    %974 = vmatprep.mubr.f32.mxu0 0.0
    %975 = vmatmul.mubr.f32.gmra.mrb[0].mxu0 %v903
    %v976 = vpop.f32.mrb[0].mxu0
    %v977 = vadd.f32 %v898, %v976
    %v978 = vpop.f32.mrb[0].mxu0
    %979 = vdwg.mxu0
    %v980 = vlaneseq
    %v981 = vshrl.u32 %v980, 7
    %v982 = vld [vmem:[%s2 + $0x1] sm:$0x1]
    %v983 = vlaneseq
    %v984 = vshrl.u32 %v983, 7
    %v985 = vsub.s32 0, %v984
    %v986 = vrot.slane %v982, %v985
    %vm987 = vcmp.eq.s32.totalorder %v981, %v986
    %v988 = vsel %vm987, 1, 0
    %v989 = vcvt.s32.f32 %v988
    %vm990 = vcmask 97280
    %v992 = vsel %vm990, %v989, 0
    %vm994 = vcmask 1043456
    %v996 = vsel %vm994, %v977, 0
    %998 = vmatprep.subr.mxu0 0.0
    %999 = vmatpush1.msra.mxu0 %v972
    %1000 = vmatprep.subr.mxu0 0.0
    %1001 = vmatpush1.msra.mxu0 %v996
    %1002 = vmatprep.subr.mxu0 0.0
    %1003 = vmatpush1.msra.mxu0 0.0
    %1004 = vmatprep.subr.mxu0 0.0
    %1005 = vmatpush1.msra.mxu0 0.0
    %1006 = vmatprep.subr.mxu0 0.0
    %1007 = vmatpush1.msra.mxu0 0.0
    %1008 = vmatprep.subr.mxu0 0.0
    %1009 = vmatpush1.msra.mxu0 0.0
    %1010 = vmatprep.subr.mxu0 0.0
    %1011 = vmatpush1.msra.mxu0 0.0
    %1012 = vmatprep.subr.mxu0 0.0
    %1013 = vmatpush1.msra.mxu0 0.0
    %1014 = vmatprep.subr.mxu0 0.0
    %1015 = vmatpush1.msra.mxu0 0.0
    %1016 = vmatprep.subr.mxu0 0.0
    %1017 = vmatpush1.msra.mxu0 0.0
    %1018 = vmatprep.subr.mxu0 0.0
    %1019 = vmatpush1.msra.mxu0 0.0
    %1020 = vmatprep.subr.mxu0 0.0
    %1021 = vmatpush1.msra.mxu0 0.0
    %1022 = vmatprep.subr.mxu0 0.0
    %1023 = vmatpush1.msra.mxu0 0.0
    %1024 = vmatprep.subr.mxu0 0.0
    %1025 = vmatpush1.msra.mxu0 0.0
    %1026 = vmatprep.subr.mxu0 0.0
    %1027 = vmatpush1.msra.mxu0 0.0
    %1028 = vmatprep.subr.mxu0 0.0
    %1029 = vmatpush1.msra.mxu0 0.0
    %1030 = vmatprep.subr.mxu0 0.0
    %1031 = vmatpush1.msra.mxu0 0.0
    %1032 = vmatprep.subr.mxu0 0.0
    %1033 = vmatpush1.msra.mxu0 0.0
    %1034 = vmatprep.subr.mxu0 0.0
    %1035 = vmatpush1.msra.mxu0 0.0
    %1036 = vmatprep.subr.mxu0 0.0
    %1037 = vmatpush1.msra.mxu0 0.0
    %1038 = vmatprep.subr.mxu0 0.0
    %1039 = vmatpush1.msra.mxu0 0.0
    %1040 = vmatprep.subr.mxu0 0.0
    %1041 = vmatpush1.msra.mxu0 0.0
    %1042 = vmatprep.subr.mxu0 0.0
    %1043 = vmatpush1.msra.mxu0 0.0
    %1044 = vmatprep.subr.mxu0 0.0
    %1045 = vmatpush1.msra.mxu0 0.0
    %1046 = vmatprep.subr.mxu0 0.0
    %1047 = vmatpush1.msra.mxu0 0.0
    %1048 = vmatprep.subr.mxu0 0.0
    %1049 = vmatpush1.msra.mxu0 0.0
    %1050 = vmatprep.subr.mxu0 0.0
    %1051 = vmatpush1.msra.mxu0 0.0
    %1052 = vmatprep.subr.mxu0 0.0
    %1053 = vmatpush1.msra.mxu0 0.0
    %1054 = vmatprep.subr.mxu0 0.0
    %1055 = vmatpush1.msra.mxu0 0.0
    %1056 = vmatprep.subr.mxu0 0.0
    %1057 = vmatpush1.msra.mxu0 0.0
    %1058 = vmatprep.subr.mxu0 0.0
    %1059 = vmatpush1.msra.mxu0 0.0
    %1060 = vmatprep.subr.mxu0 0.0
    %1061 = vmatpush1.msra.mxu0 0.0
    %1062 = vmatprep.mubr.f32.mxu0 0.0
    %1063 = vmatmul.mubr.f32.gmra.mrb[0].mxu0 %v992
    %v1064 = vpop.f32.mrb[0].mxu0
    %v1065 = vadd.f32 0.0, %v1064
    %v1066 = vpop.f32.mrb[0].mxu0
    %1067 = vdwg.mxu0
    %v1068 = vld [vmem:[#allocation2 + $0x138] sm:$0xff]
    %v1069 = vld [vmem:[#allocation2 + $0x150] sm:$0xff]
    %v1071 = vsel %vm40, %v1065, 0
    %1073 = vmatprep.subr.mxu0 0.0
    %1074 = vmatpush1.msra.mxu0 %v1069
    %1075 = vmatprep.subr.mxu0 0.0
    %1076 = vmatpush1.msra.mxu0 0.0
    %1077 = vmatprep.subr.mxu0 0.0
    %1078 = vmatpush1.msra.mxu0 0.0
    %1079 = vmatprep.subr.mxu0 0.0
    %1080 = vmatpush1.msra.mxu0 0.0
    %1081 = vmatprep.subr.mxu0 0.0
    %1082 = vmatpush1.msra.mxu0 0.0
    %1083 = vmatprep.subr.mxu0 0.0
    %1084 = vmatpush1.msra.mxu0 0.0
    %1085 = vmatprep.subr.mxu0 0.0
    %1086 = vmatpush1.msra.mxu0 0.0
    %1087 = vmatprep.subr.mxu0 0.0
    %1088 = vmatpush1.msra.mxu0 0.0
    %1089 = vmatprep.subr.mxu0 0.0
    %1090 = vmatpush1.msra.mxu0 0.0
    %1091 = vmatprep.subr.mxu0 0.0
    %1092 = vmatpush1.msra.mxu0 0.0
    %1093 = vmatprep.subr.mxu0 0.0
    %1094 = vmatpush1.msra.mxu0 0.0
    %1095 = vmatprep.subr.mxu0 0.0
    %1096 = vmatpush1.msra.mxu0 0.0
    %1097 = vmatprep.subr.mxu0 0.0
    %1098 = vmatpush1.msra.mxu0 0.0
    %1099 = vmatprep.subr.mxu0 0.0
    %1100 = vmatpush1.msra.mxu0 0.0
    %1101 = vmatprep.subr.mxu0 0.0
    %1102 = vmatpush1.msra.mxu0 0.0
    %1103 = vmatprep.subr.mxu0 0.0
    %1104 = vmatpush1.msra.mxu0 0.0
    %1105 = vmatprep.subr.mxu0 0.0
    %1106 = vmatpush1.msra.mxu0 0.0
    %1107 = vmatprep.subr.mxu0 0.0
    %1108 = vmatpush1.msra.mxu0 0.0
    %1109 = vmatprep.subr.mxu0 0.0
    %1110 = vmatpush1.msra.mxu0 0.0
    %1111 = vmatprep.subr.mxu0 0.0
    %1112 = vmatpush1.msra.mxu0 0.0
    %1113 = vmatprep.subr.mxu0 0.0
    %1114 = vmatpush1.msra.mxu0 0.0
    %1115 = vmatprep.subr.mxu0 0.0
    %1116 = vmatpush1.msra.mxu0 0.0
    %1117 = vmatprep.subr.mxu0 0.0
    %1118 = vmatpush1.msra.mxu0 0.0
    %1119 = vmatprep.subr.mxu0 0.0
    %1120 = vmatpush1.msra.mxu0 0.0
    %1121 = vmatprep.subr.mxu0 0.0
    %1122 = vmatpush1.msra.mxu0 0.0
    %1123 = vmatprep.subr.mxu0 0.0
    %1124 = vmatpush1.msra.mxu0 0.0
    %1125 = vmatprep.subr.mxu0 0.0
    %1126 = vmatpush1.msra.mxu0 0.0
    %1127 = vmatprep.subr.mxu0 0.0
    %1128 = vmatpush1.msra.mxu0 0.0
    %1129 = vmatprep.subr.mxu0 0.0
    %1130 = vmatpush1.msra.mxu0 0.0
    %1131 = vmatprep.subr.mxu0 0.0
    %1132 = vmatpush1.msra.mxu0 0.0
    %1133 = vmatprep.subr.mxu0 0.0
    %1134 = vmatpush1.msra.mxu0 0.0
    %1135 = vmatprep.subr.mxu0 0.0
    %1136 = vmatpush1.msra.mxu0 0.0
    %1137 = vmatprep.mubr.f32.mxu0 0.0
    %1138 = vmatmul.mubr.f32.gmra.mrb[0].mxu0 %v1071
    %v1139 = vpop.f32.mrb[0].mxu0
    %v1140 = vadd.f32 0.0, %v1139
    %v1141 = vpop.f32.mrb[0].mxu0
    %1142 = vdwg.mxu0
    %1143 = vmatprep.subr.mxu0 0.0
    %1144 = vmatpush1.msra.mxu0 %v1068
    %1145 = vmatprep.subr.mxu0 0.0
    %1146 = vmatpush1.msra.mxu0 0.0
    %1147 = vmatprep.subr.mxu0 0.0
    %1148 = vmatpush1.msra.mxu0 0.0
    %1149 = vmatprep.subr.mxu0 0.0
    %1150 = vmatpush1.msra.mxu0 0.0
    %1151 = vmatprep.subr.mxu0 0.0
    %1152 = vmatpush1.msra.mxu0 0.0
    %1153 = vmatprep.subr.mxu0 0.0
    %1154 = vmatpush1.msra.mxu0 0.0
    %1155 = vmatprep.subr.mxu0 0.0
    %1156 = vmatpush1.msra.mxu0 0.0
    %1157 = vmatprep.subr.mxu0 0.0
    %1158 = vmatpush1.msra.mxu0 0.0
    %1159 = vmatprep.subr.mxu0 0.0
    %1160 = vmatpush1.msra.mxu0 0.0
    %1161 = vmatprep.subr.mxu0 0.0
    %1162 = vmatpush1.msra.mxu0 0.0
    %1163 = vmatprep.subr.mxu0 0.0
    %1164 = vmatpush1.msra.mxu0 0.0
    %1165 = vmatprep.subr.mxu0 0.0
    %1166 = vmatpush1.msra.mxu0 0.0
    %1167 = vmatprep.subr.mxu0 0.0
    %1168 = vmatpush1.msra.mxu0 0.0
    %1169 = vmatprep.subr.mxu0 0.0
    %1170 = vmatpush1.msra.mxu0 0.0
    %1171 = vmatprep.subr.mxu0 0.0
    %1172 = vmatpush1.msra.mxu0 0.0
    %1173 = vmatprep.subr.mxu0 0.0
    %1174 = vmatpush1.msra.mxu0 0.0
    %1175 = vmatprep.subr.mxu0 0.0
    %1176 = vmatpush1.msra.mxu0 0.0
    %1177 = vmatprep.subr.mxu0 0.0
    %1178 = vmatpush1.msra.mxu0 0.0
    %1179 = vmatprep.subr.mxu0 0.0
    %1180 = vmatpush1.msra.mxu0 0.0
    %1181 = vmatprep.subr.mxu0 0.0
    %1182 = vmatpush1.msra.mxu0 0.0
    %1183 = vmatprep.subr.mxu0 0.0
    %1184 = vmatpush1.msra.mxu0 0.0
    %1185 = vmatprep.subr.mxu0 0.0
    %1186 = vmatpush1.msra.mxu0 0.0
    %1187 = vmatprep.subr.mxu0 0.0
    %1188 = vmatpush1.msra.mxu0 0.0
    %1189 = vmatprep.subr.mxu0 0.0
    %1190 = vmatpush1.msra.mxu0 0.0
    %1191 = vmatprep.subr.mxu0 0.0
    %1192 = vmatpush1.msra.mxu0 0.0
    %1193 = vmatprep.subr.mxu0 0.0
    %1194 = vmatpush1.msra.mxu0 0.0
    %1195 = vmatprep.subr.mxu0 0.0
    %1196 = vmatpush1.msra.mxu0 0.0
    %1197 = vmatprep.subr.mxu0 0.0
    %1198 = vmatpush1.msra.mxu0 0.0
    %1199 = vmatprep.subr.mxu0 0.0
    %1200 = vmatpush1.msra.mxu0 0.0
    %1201 = vmatprep.subr.mxu0 0.0
    %1202 = vmatpush1.msra.mxu0 0.0
    %1203 = vmatprep.subr.mxu0 0.0
    %1204 = vmatpush1.msra.mxu0 0.0
    %1205 = vmatprep.subr.mxu0 0.0
    %1206 = vmatpush1.msra.mxu0 0.0
    %1207 = vmatprep.mubr.f32.mxu0 0.0
    %1208 = vmatmul.mubr.f32.gmra.mrb[0].mxu0 %v628
    %v1209 = vpop.f32.mrb[0].mxu0
    %v1210 = vadd.f32 %v1140, %v1209
    %v1211 = vpop.f32.mrb[0].mxu0
    %1212 = vdwg.mxu0
    %v1213 = vld [vmem:[#allocation2 + $0x7] ss:$0 sm:$0xff]
    %v1214 = vadd.f32 %v1210, %v1213
    %v1215 = vmax.f32 %v1214, 0.0
    %v1216 = vld [vmem:[#allocation2 + $0x168] sm:$0xff]
    %v1217 = vld [vmem:[#allocation2 + $0x180] sm:$0xff]
    %v1218 = vld [vmem:[#allocation2 + $0x18] ss:$0 sm:$0xff]
    %v1220 = vsel %vm118, %v1215, 0
    %1222 = vmatprep.subr.mxu0 0.0
    %1223 = vmatpush1.msra.mxu0 %v1216
    %1224 = vmatprep.subr.mxu0 0.0
    %1225 = vmatpush1.msra.mxu0 %v1217
    %1226 = vmatprep.subr.mxu0 0.0
    %1227 = vmatpush1.msra.mxu0 0.0
    %1228 = vmatprep.subr.mxu0 0.0
    %1229 = vmatpush1.msra.mxu0 0.0
    %1230 = vmatprep.subr.mxu0 0.0
    %1231 = vmatpush1.msra.mxu0 0.0
    %1232 = vmatprep.subr.mxu0 0.0
    %1233 = vmatpush1.msra.mxu0 0.0
    %1234 = vmatprep.subr.mxu0 0.0
    %1235 = vmatpush1.msra.mxu0 0.0
    %1236 = vmatprep.subr.mxu0 0.0
    %1237 = vmatpush1.msra.mxu0 0.0
    %1238 = vmatprep.subr.mxu0 0.0
    %1239 = vmatpush1.msra.mxu0 0.0
    %1240 = vmatprep.subr.mxu0 0.0
    %1241 = vmatpush1.msra.mxu0 0.0
    %1242 = vmatprep.subr.mxu0 0.0
    %1243 = vmatpush1.msra.mxu0 0.0
    %1244 = vmatprep.subr.mxu0 0.0
    %1245 = vmatpush1.msra.mxu0 0.0
    %1246 = vmatprep.subr.mxu0 0.0
    %1247 = vmatpush1.msra.mxu0 0.0
    %1248 = vmatprep.subr.mxu0 0.0
    %1249 = vmatpush1.msra.mxu0 0.0
    %1250 = vmatprep.subr.mxu0 0.0
    %1251 = vmatpush1.msra.mxu0 0.0
    %1252 = vmatprep.subr.mxu0 0.0
    %1253 = vmatpush1.msra.mxu0 0.0
    %1254 = vmatprep.subr.mxu0 0.0
    %1255 = vmatpush1.msra.mxu0 0.0
    %1256 = vmatprep.subr.mxu0 0.0
    %1257 = vmatpush1.msra.mxu0 0.0
    %1258 = vmatprep.subr.mxu0 0.0
    %1259 = vmatpush1.msra.mxu0 0.0
    %1260 = vmatprep.subr.mxu0 0.0
    %1261 = vmatpush1.msra.mxu0 0.0
    %1262 = vmatprep.subr.mxu0 0.0
    %1263 = vmatpush1.msra.mxu0 0.0
    %1264 = vmatprep.subr.mxu0 0.0
    %1265 = vmatpush1.msra.mxu0 0.0
    %1266 = vmatprep.subr.mxu0 0.0
    %1267 = vmatpush1.msra.mxu0 0.0
    %1268 = vmatprep.subr.mxu0 0.0
    %1269 = vmatpush1.msra.mxu0 0.0
    %1270 = vmatprep.subr.mxu0 0.0
    %1271 = vmatpush1.msra.mxu0 0.0
    %1272 = vmatprep.subr.mxu0 0.0
    %1273 = vmatpush1.msra.mxu0 0.0
    %1274 = vmatprep.subr.mxu0 0.0
    %1275 = vmatpush1.msra.mxu0 0.0
    %1276 = vmatprep.subr.mxu0 0.0
    %1277 = vmatpush1.msra.mxu0 0.0
    %1278 = vmatprep.subr.mxu0 0.0
    %1279 = vmatpush1.msra.mxu0 0.0
    %1280 = vmatprep.subr.mxu0 0.0
    %1281 = vmatpush1.msra.mxu0 0.0
    %1282 = vmatprep.subr.mxu0 0.0
    %1283 = vmatpush1.msra.mxu0 0.0
    %1284 = vmatprep.subr.mxu0 0.0
    %1285 = vmatpush1.msra.mxu0 0.0
    %1286 = vmatprep.mubr.f32.mxu0 0.0
    %1287 = vmatmul.mubr.f32.gmra.mrb[0].mxu0 %v1220
    %v1288 = vpop.f32.mrb[0].mxu0
    %v1289 = vadd.f32 %v1218, %v1288
    %v1290 = vpop.f32.mrb[0].mxu0
    %1291 = vdwg.mxu0
    %v1292 = vld [vmem:[#allocation2 + $0x198] sm:$0xff]
    %v1293 = vld [vmem:[#allocation2 + $0x19] ss:$0 sm:$0xff]
    %v1295 = vsel %vm40, %v1289, 0
    %1297 = vmatprep.subr.mxu0 0.0
    %1298 = vmatpush1.msra.mxu0 %v1292
    %1299 = vmatprep.subr.mxu0 0.0
    %1300 = vmatpush1.msra.mxu0 0.0
    %1301 = vmatprep.subr.mxu0 0.0
    %1302 = vmatpush1.msra.mxu0 0.0
    %1303 = vmatprep.subr.mxu0 0.0
    %1304 = vmatpush1.msra.mxu0 0.0
    %1305 = vmatprep.subr.mxu0 0.0
    %1306 = vmatpush1.msra.mxu0 0.0
    %1307 = vmatprep.subr.mxu0 0.0
    %1308 = vmatpush1.msra.mxu0 0.0
    %1309 = vmatprep.subr.mxu0 0.0
    %1310 = vmatpush1.msra.mxu0 0.0
    %1311 = vmatprep.subr.mxu0 0.0
    %1312 = vmatpush1.msra.mxu0 0.0
    %1313 = vmatprep.subr.mxu0 0.0
    %1314 = vmatpush1.msra.mxu0 0.0
    %1315 = vmatprep.subr.mxu0 0.0
    %1316 = vmatpush1.msra.mxu0 0.0
    %1317 = vmatprep.subr.mxu0 0.0
    %1318 = vmatpush1.msra.mxu0 0.0
    %1319 = vmatprep.subr.mxu0 0.0
    %1320 = vmatpush1.msra.mxu0 0.0
    %1321 = vmatprep.subr.mxu0 0.0
    %1322 = vmatpush1.msra.mxu0 0.0
    %1323 = vmatprep.subr.mxu0 0.0
    %1324 = vmatpush1.msra.mxu0 0.0
    %1325 = vmatprep.subr.mxu0 0.0
    %1326 = vmatpush1.msra.mxu0 0.0
    %1327 = vmatprep.subr.mxu0 0.0
    %1328 = vmatpush1.msra.mxu0 0.0
    %1329 = vmatprep.subr.mxu0 0.0
    %1330 = vmatpush1.msra.mxu0 0.0
    %1331 = vmatprep.subr.mxu0 0.0
    %1332 = vmatpush1.msra.mxu0 0.0
    %1333 = vmatprep.subr.mxu0 0.0
    %1334 = vmatpush1.msra.mxu0 0.0
    %1335 = vmatprep.subr.mxu0 0.0
    %1336 = vmatpush1.msra.mxu0 0.0
    %1337 = vmatprep.subr.mxu0 0.0
    %1338 = vmatpush1.msra.mxu0 0.0
    %1339 = vmatprep.subr.mxu0 0.0
    %1340 = vmatpush1.msra.mxu0 0.0
    %1341 = vmatprep.subr.mxu0 0.0
    %1342 = vmatpush1.msra.mxu0 0.0
    %1343 = vmatprep.subr.mxu0 0.0
    %1344 = vmatpush1.msra.mxu0 0.0
    %1345 = vmatprep.subr.mxu0 0.0
    %1346 = vmatpush1.msra.mxu0 0.0
    %1347 = vmatprep.subr.mxu0 0.0
    %1348 = vmatpush1.msra.mxu0 0.0
    %1349 = vmatprep.subr.mxu0 0.0
    %1350 = vmatpush1.msra.mxu0 0.0
    %1351 = vmatprep.subr.mxu0 0.0
    %1352 = vmatpush1.msra.mxu0 0.0
    %1353 = vmatprep.subr.mxu0 0.0
    %1354 = vmatpush1.msra.mxu0 0.0
    %1355 = vmatprep.subr.mxu0 0.0
    %1356 = vmatpush1.msra.mxu0 0.0
    %1357 = vmatprep.subr.mxu0 0.0
    %1358 = vmatpush1.msra.mxu0 0.0
    %1359 = vmatprep.subr.mxu0 0.0
    %1360 = vmatpush1.msra.mxu0 0.0
    %1361 = vmatprep.mubr.f32.mxu0 0.0
    %1362 = vmatmul.mubr.f32.gmra.mrb[0].mxu0 %v1295
    %v1363 = vpop.f32.mrb[0].mxu0
    %v1364 = vadd.f32 %v1293, %v1363
    %v1365 = vpop.f32.mrb[0].mxu0
    %1366 = vdwg.mxu0
    %v1367 = vmax.f32 %v1364, 0.0
    %v1368 = vld [vmem:[#allocation2 + $0x1b0] sm:$0xff]
    %v1369 = vld [vmem:[#allocation2 + $0x1c8] sm:$0xff]
    %v1370 = vld [vmem:[#allocation2 + $0x1a] ss:$0 sm:$0xff]
    %v1372 = vsel %vm118, %v1367, 0
    %1374 = vmatprep.subr.mxu0 0.0
    %1375 = vmatpush1.msra.mxu0 %v1368
    %1376 = vmatprep.subr.mxu0 0.0
    %1377 = vmatpush1.msra.mxu0 %v1369
    %1378 = vmatprep.subr.mxu0 0.0
    %1379 = vmatpush1.msra.mxu0 0.0
    %1380 = vmatprep.subr.mxu0 0.0
    %1381 = vmatpush1.msra.mxu0 0.0
    %1382 = vmatprep.subr.mxu0 0.0
    %1383 = vmatpush1.msra.mxu0 0.0
    %1384 = vmatprep.subr.mxu0 0.0
    %1385 = vmatpush1.msra.mxu0 0.0
    %1386 = vmatprep.subr.mxu0 0.0
    %1387 = vmatpush1.msra.mxu0 0.0
    %1388 = vmatprep.subr.mxu0 0.0
    %1389 = vmatpush1.msra.mxu0 0.0
    %1390 = vmatprep.subr.mxu0 0.0
    %1391 = vmatpush1.msra.mxu0 0.0
    %1392 = vmatprep.subr.mxu0 0.0
    %1393 = vmatpush1.msra.mxu0 0.0
    %1394 = vmatprep.subr.mxu0 0.0
    %1395 = vmatpush1.msra.mxu0 0.0
    %1396 = vmatprep.subr.mxu0 0.0
    %1397 = vmatpush1.msra.mxu0 0.0
    %1398 = vmatprep.subr.mxu0 0.0
    %1399 = vmatpush1.msra.mxu0 0.0
    %1400 = vmatprep.subr.mxu0 0.0
    %1401 = vmatpush1.msra.mxu0 0.0
    %1402 = vmatprep.subr.mxu0 0.0
    %1403 = vmatpush1.msra.mxu0 0.0
    %1404 = vmatprep.subr.mxu0 0.0
    %1405 = vmatpush1.msra.mxu0 0.0
    %1406 = vmatprep.subr.mxu0 0.0
    %1407 = vmatpush1.msra.mxu0 0.0
    %1408 = vmatprep.subr.mxu0 0.0
    %1409 = vmatpush1.msra.mxu0 0.0
    %1410 = vmatprep.subr.mxu0 0.0
    %1411 = vmatpush1.msra.mxu0 0.0
    %1412 = vmatprep.subr.mxu0 0.0
    %1413 = vmatpush1.msra.mxu0 0.0
    %1414 = vmatprep.subr.mxu0 0.0
    %1415 = vmatpush1.msra.mxu0 0.0
    %1416 = vmatprep.subr.mxu0 0.0
    %1417 = vmatpush1.msra.mxu0 0.0
    %1418 = vmatprep.subr.mxu0 0.0
    %1419 = vmatpush1.msra.mxu0 0.0
    %1420 = vmatprep.subr.mxu0 0.0
    %1421 = vmatpush1.msra.mxu0 0.0
    %1422 = vmatprep.subr.mxu0 0.0
    %1423 = vmatpush1.msra.mxu0 0.0
    %1424 = vmatprep.subr.mxu0 0.0
    %1425 = vmatpush1.msra.mxu0 0.0
    %1426 = vmatprep.subr.mxu0 0.0
    %1427 = vmatpush1.msra.mxu0 0.0
    %1428 = vmatprep.subr.mxu0 0.0
    %1429 = vmatpush1.msra.mxu0 0.0
    %1430 = vmatprep.subr.mxu0 0.0
    %1431 = vmatpush1.msra.mxu0 0.0
    %1432 = vmatprep.subr.mxu0 0.0
    %1433 = vmatpush1.msra.mxu0 0.0
    %1434 = vmatprep.subr.mxu0 0.0
    %1435 = vmatpush1.msra.mxu0 0.0
    %1436 = vmatprep.subr.mxu0 0.0
    %1437 = vmatpush1.msra.mxu0 0.0
    %1438 = vmatprep.mubr.f32.mxu0 0.0
    %1439 = vmatmul.mubr.f32.gmra.mrb[0].mxu0 %v1372
    %v1440 = vpop.f32.mrb[0].mxu0
    %v1441 = vadd.f32 %v1370, %v1440
    %v1442 = vpop.f32.mrb[0].mxu0
    %1443 = vdwg.mxu0
    %1444 = vst [vmem:[#allocation5] sm:$0xff] %v1441
    // Predicated region
    $region26: #{oppo_model_forward.1} parent=1 // pred_check
      _
    $region27: #{oppo_model_forward.1} parent=1 // pred_check_branch
      %1446 = sbr.rel (0) target = $region29
    $region28: #{oppo_model_forward.1} parent=1 // pred_region
      %s1448 = ssub.s32 128, 128
      %1449 = vsyncadd [#allocation4], %s1448
      %s1451 = sshll.u32 [#allocation5], 4
      %s1452 = int_to_ptr.vmem [resolvable:$true] %s1451
      %1454 = dma.vmem_to_hbm [thread:$0]  %s1452, 128, %s5, [#allocation4]
    $region29: #{oppo_model_forward.1} parent=1 // pred_fallthru
      _
    // Predicated region
    $region30: #{oppo_model_forward.1} parent=1 // pred_check
      _
    $region31: #{oppo_model_forward.1} parent=1 // pred_check_branch
      %1456 = sbr.rel (0) target = $region33
    $region32: #{oppo_model_forward.1} parent=1 // pred_region
      _
    $region33: #{oppo_model_forward.1} parent=1 // pred_fallthru
      _
    // Predicated region
    $region34: #{oppo_model_forward.1} parent=1 // pred_check
      _
    $region35: #{oppo_model_forward.1} parent=1 // pred_check_branch
      %1458 = sbr.rel (0) target = $region37
    $region36: #{oppo_model_forward.1} parent=1 // pred_region
      %1459 = dma.done [#allocation4], 128
    $region37: #{oppo_model_forward.1} parent=1 // pred_fallthru
      _
    // Predicated region
    $region38: #{oppo_model_forward.1} parent=1 // pred_check
      _
    $region39: #{oppo_model_forward.1} parent=1 // pred_check_branch
      %1461 = sbr.rel (0) target = $region41
    $region40: #{oppo_model_forward.1} parent=1 // pred_region
      _
    $region41: #{oppo_model_forward.1} parent=1 // pred_fallthru
      _
    %1462 = vsyncpa [#allocation3], 1
    %1463 = vsyncpa [#allocation4], 1

</llo_original>
